<compile_context>
chip_gen: v6e
topology: v6e:2x2x1
jax: 0.10.0
libtpu: 0.0.40
codegen_flags: <defaults>
</compile_context>

<pallas_src>
import functools

import jax
import jax.numpy as jnp
import numpy as np
from jax.experimental import pallas as pl
from jax.experimental.pallas import tpu as pltpu


# ----------------------------------------------------------------------------
# Pallas kernel: one lane-concatenated slab (C, L) per grid step, L = Bb*HWp.
# ----------------------------------------------------------------------------
def bam_kernel(x_ref, wc1_ref, bc1_ref, wc2_ref, bc2_ref, pool_ref, bcast_ref,
               w0_ref, b0_ref, w1_ref, b1_ref, bn2s_ref, bn2b_ref,
               w2_ref, b2_ref, w3_ref, b3_ref, mask_ref,
               o_ref, *, width, dilation):
    _, L = x_ref.shape
    x = x_ref[...]                                           # (C, L) f32, lane-dense

    # ---------------- channel attention (narrow) ----------------
    # per-image global average pool as one matmul; 1x1 convs at lane width nimg;
    # broadcast back per image with a 0/1 indicator matmul.  All f32 (tiny).
    avgs = jnp.dot(x, pool_ref[...], preferred_element_type=jnp.float32)      # (C, nimg)
    h = jnp.dot(wc1_ref[...], avgs,
                preferred_element_type=jnp.float32) + bc1_ref[...]            # (Cr, nimg)
    h = jnp.maximum(h, 0.0)
    ca = jnp.dot(wc2_ref[...], h,
                 preferred_element_type=jnp.float32) + bc2_ref[...]           # (C, nimg)
    ca_full = jnp.dot(ca, bcast_ref[...],
                      preferred_element_type=jnp.float32)                     # (C, L)

    # ---------------- spatial attention (bf16 MXU operands, f32 accum) ----------------
    xb = x.astype(jnp.bfloat16)
    t = jnp.dot(w0_ref[...], xb,
                preferred_element_type=jnp.float32) + b0_ref[...]             # (Cr, L)

    def dilated_conv3x3(tin, wpk_ref, b_ref):
        # 3x3 conv, dilation=d, zero padding=d, on the flattened slab.  The 9
        # taps (lane rotation + constant boundary mask) are packed along the
        # contraction dim and consumed by a single (Cr, 9*Cr)@(9*Cr, L) matmul.
        pieces = []
        for ky in range(3):
            for kx in range(3):
                tap = ky * 3 + kx
                off = (ky - 1) * dilation * width + (kx - 1) * dilation
                if off == 0:
                    pieces.append(tin)                       # center tap, always valid
                else:
                    pieces.append(pltpu.roll(tin, (-off) % L, 1) *
                                  mask_ref[tap:tap + 1, :])
        slab = jnp.concatenate(pieces, axis=0).astype(jnp.bfloat16)   # (9*Cr, L)
        return jnp.dot(wpk_ref[...], slab,
                       preferred_element_type=jnp.float32) + b_ref[...]

    t = jnp.maximum(dilated_conv3x3(t, w1_ref, b1_ref), 0.0)  # conv3x3 #1 (+BN1), ReLU
    t = t * bn2s_ref[...] + bn2b_ref[...]                     # BN2 (inference, pre-pad exact)
    t = jnp.maximum(dilated_conv3x3(t, w2_ref, b2_ref), 0.0)  # conv3x3 #2 (+BN3), ReLU
    s = jnp.dot(w3_ref[...], t.astype(jnp.bfloat16),
                preferred_element_type=jnp.float32) + b3_ref[...]      # (1, L)

    # ---------------- combine ----------------
    y = s + ca_full                                           # (C, L)
    o_ref[...] = ((1.0 + jax.nn.sigmoid(y)) * x).astype(o_ref.dtype)


def _rep_spec(shape):
    nd = len(shape)
    return pl.BlockSpec(shape, lambda i, _nd=nd: (0,) * _nd)


def _images_per_block(B, HWp, lane_target=2048):
    """Largest divisor of B whose lane-concatenated width stays <= lane_target."""
    cap = max(1, lane_target // HWp)
    best = 1
    for cand in range(1, min(B, cap) + 1):
        if B % cand == 0:
            best = cand
    return best


def _lane_constants(H, W, d, HWp, Bb):
    """Tap-validity masks (9, Bb*HWp), per-image pooling (Bb*HWp, Bb) and
    per-image broadcast (Bb, Bb*HWp) matrices for the lane-concatenated layout."""
    HW = H * W
    yy = np.arange(H)[:, None]
    xx = np.arange(W)[None, :]
    m = np.zeros((9, HWp), np.float32)
    for ky in range(3):
        for kx in range(3):
            dy, dx = (ky - 1) * d, (kx - 1) * d
            valid = ((yy + dy >= 0) & (yy + dy < H) &
                     (xx + dx >= 0) & (xx + dx < W))
            m[ky * 3 + kx, :HW] = valid.reshape(-1).astype(np.float32)
    masks = np.tile(m, (1, Bb))                                  # (9, Lp)

    Lp = Bb * HWp
    img = np.arange(Lp) // HWp
    pos = np.arange(Lp) % HWp
    pool = np.zeros((Lp, Bb), np.float32)
    pool[np.arange(Lp), img] = (pos < HW).astype(np.float32) / float(HW)
    bcast = np.zeros((Bb, Lp), np.float32)
    bcast[img, np.arange(Lp)] = 1.0
    return jnp.asarray(masks), jnp.asarray(pool), jnp.asarray(bcast)


# ----------------------------------------------------------------------------
# Wrapper: NCHW in / NCHW out.  BN folding + weight re-packing at prep time.
# ----------------------------------------------------------------------------
@functools.partial(jax.jit, static_argnames=("dilation",))
def bam_pallas(x_nchw, params, dilation=2):
    B, C, H, W = x_nchw.shape
    HW = H * W
    HWp = ((HW + 127) // 128) * 128              # lane-dense spatial extent
    d = dilation
    Cr = params["ws0"].shape[0]
    eps = 1e-5

    Bb = _images_per_block(B, HWp)               # images packed per grid step
    Lp = Bb * HWp
    grid = (B // Bb,)

    scale = params["bn_gamma"] / jnp.sqrt(params["bn_var"] + eps)   # (4, Cr)
    shift = params["bn_beta"] - params["bn_mean"] * scale

    # --- fold BN0 / BN1 / BN3 into the adjacent conv weights/biases (exact) ---
    w0 = (params["ws0"] * scale[0][:, None]).astype(jnp.bfloat16)   # 1x1 conv (+BN0)
    b0 = (params["bs0"] * scale[0] + shift[0]).reshape(Cr, 1)
    w1 = params["ws1"] * scale[1][:, None, None, None]              # 3x3 conv #1 (+BN1)
    b1 = (params["bs1"] * scale[1] + shift[1]).reshape(Cr, 1)
    w2 = params["ws2"] * scale[3][:, None, None, None]              # 3x3 conv #2 (+BN3)
    b2 = (params["bs2"] * scale[3] + shift[3]).reshape(Cr, 1)
    bn2s = scale[2].reshape(Cr, 1)                                  # BN2 stays in-kernel
    bn2b = shift[2].reshape(Cr, 1)                                  #   (exact w.r.t. zero padding)

    # 3x3 weights OIHW -> (Cr, 9*Cr): column block tap*Cr:(tap+1)*Cr == W[:, :, ky, kx]
    w1_pk = jnp.transpose(w1, (0, 2, 3, 1)).reshape(Cr, 9 * Cr).astype(jnp.bfloat16)
    w2_pk = jnp.transpose(w2, (0, 2, 3, 1)).reshape(Cr, 9 * Cr).astype(jnp.bfloat16)

    wc1 = params["wc1"]                          # (Cr, C)  channel branch stays f32
    bc1 = params["bc1"].reshape(Cr, 1)
    wc2 = params["wc2"]                          # (C, Cr)
    bc2 = params["bc2"].reshape(C, 1)
    w3 = params["ws3"].astype(jnp.bfloat16)      # (1, Cr)  final Cr->1 projection
    b3 = params["bs3"].reshape(1, 1)

    masks, pool, bcast = _lane_constants(H, W, d, HWp, Bb)

    # NCHW -> (C, B*HWp): images concatenated along the lane axis.
    x3 = x_nchw.reshape(B, C, HW)
    if HWp != HW:
        x3 = jnp.pad(x3, ((0, 0), (0, 0), (0, HWp - HW)))
    x2d = jnp.transpose(x3, (1, 0, 2)).reshape(C, B * HWp)

    inputs = [x2d, wc1, bc1, wc2, bc2, pool, bcast, w0, b0, w1_pk, b1,
              bn2s, bn2b, w2_pk, b2, w3, b3, masks]

    in_specs = [pl.BlockSpec((C, Lp), lambda i: (0, i))]
    in_specs += [_rep_spec(a.shape) for a in inputs[1:]]

    # Explicit VMEM budget: double-buffered I/O blocks + live intermediates
    # (keeps the same tiling viable on v7x's 64 MiB VMEM / 32 MiB scoped default).
    blk_bytes = C * Lp * 4
    live_bytes = (3 * C + 24 * Cr) * Lp * 4
    vmem_limit = int(min(max(4 * blk_bytes + 2 * live_bytes, 32 << 20), 96 << 20))

    out2d = pl.pallas_call(
        functools.partial(bam_kernel, width=W, dilation=d),
        out_shape=jax.ShapeDtypeStruct((C, B * HWp), x_nchw.dtype),
        grid=grid,
        in_specs=in_specs,
        out_specs=pl.BlockSpec((C, Lp), lambda i: (0, i)),
        compiler_params=pltpu.CompilerParams(
            dimension_semantics=("parallel",),
            vmem_limit_bytes=vmem_limit),
    )(*inputs)

    out3 = jnp.transpose(out2d.reshape(C, B, HWp), (1, 0, 2))[:, :, :HW]
    return out3.reshape(B, C, H, W)


# ----------------------------------------------------------------------------
# Pure-JAX reference (NCHW throughout) for correctness check.
# ----------------------------------------------------------------------------
def bam_reference(x, p, d=2):
    eps = 1e-5
    scale = p["bn_gamma"] / jnp.sqrt(p["bn_var"] + eps)
    shift = p["bn_beta"] - p["bn_mean"] * scale

    # channel attention
    avg = jnp.mean(x, axis=(2, 3), keepdims=True)                       # (B,C,1,1)
    h = jnp.einsum("rc,bcij->brij", p["wc1"], avg) + p["bc1"][None, :, None, None]
    h = jax.nn.relu(h)
    ca = jnp.einsum("cr,brij->bcij", p["wc2"], h) + p["bc2"][None, :, None, None]

    def bn(v, i):
        return v * scale[i][None, :, None, None] + shift[i][None, :, None, None]

    dn = ("NCHW", "OIHW", "NCHW")
    t = jnp.einsum("rc,bchw->brhw", p["ws0"], x) + p["bs0"][None, :, None, None]
    t = bn(t, 0)
    t = jax.lax.conv_general_dilated(t, p["ws1"], (1, 1), ((d, d), (d, d)),
                                     rhs_dilation=(d, d),
                                     dimension_numbers=dn) + p["bs1"][None, :, None, None]
    t = bn(t, 1)
    t = jax.nn.relu(t)
    t = bn(t, 2)
    t = jax.lax.conv_general_dilated(t, p["ws2"], (1, 1), ((d, d), (d, d)),
                                     rhs_dilation=(d, d),
                                     dimension_numbers=dn) + p["bs2"][None, :, None, None]
    t = bn(t, 3)
    t = jax.nn.relu(t)
    s = jnp.einsum("or,brhw->bohw", p["ws3"], t) + p["bs3"][None, :, None, None]

    y = s + ca
    return (1.0 + jax.nn.sigmoid(y)) * x


def make_params(key, C, reduction=16):
    Cr = C // reduction
    ks = jax.random.split(key, 16)
    f32 = jnp.float32

    def rnd(k, shape, s=0.1):
        return jax.random.normal(k, shape, f32) * s

    p = {
        # channel attention (Conv2d weights stored as (Cout, Cin))
        "wc1": rnd(ks[0], (Cr, C)), "bc1": rnd(ks[1], (Cr,)),
        "wc2": rnd(ks[2], (C, Cr)), "bc2": rnd(ks[3], (C,)),
        # spatial attention
        "ws0": rnd(ks[4], (Cr, C)), "bs0": rnd(ks[5], (Cr,)),
        "ws1": rnd(ks[6], (Cr, Cr, 3, 3)), "bs1": rnd(ks[7], (Cr,)),
        "ws2": rnd(ks[8], (Cr, Cr, 3, 3)), "bs2": rnd(ks[9], (Cr,)),
        "ws3": rnd(ks[10], (1, Cr), 0.3), "bs3": rnd(ks[11], (1,), 0.1),
        # BatchNorm (inference mode) affine params + running stats
        "bn_gamma": 1.0 + 0.1 * jax.random.normal(ks[12], (4, Cr), f32),
        "bn_beta": 0.1 * jax.random.normal(ks[13], (4, Cr), f32),
        "bn_mean": 0.1 * jax.random.normal(ks[14], (4, Cr), f32),
        "bn_var": 1.0 + 0.1 * jax.random.uniform(ks[15], (4, Cr), f32),
    }
    return p


if __name__ == "__main__":
    B, C, H, W = 2, 32, 16, 16
    reduction, dilation = 16, 2

    key = jax.random.PRNGKey(0)
    k_x, k_p = jax.random.split(key)
    x = jax.random.normal(k_x, (B, C, H, W), jnp.float32)
    params = make_params(k_p, C, reduction)

    out = jax.block_until_ready(bam_pallas(x, params, dilation=dilation))
    ref = jax.block_until_ready(bam_reference(x, params, d=dilation))
    np.testing.assert_allclose(np.asarray(out), np.asarray(ref),
                               rtol=3e-3, atol=3e-3)

    print("KERNEL_OK")
</pallas_src>

<mosaic_0001>
module attributes {stable_mosaic.version = 11 : i64} {
  func.func @bam_kernel(%arg0: i32, %arg1: memref<32x512xf32, #tpu.memory_space<vmem>>, %arg2: memref<2x32xf32, #tpu.memory_space<vmem>>, %arg3: memref<2x1xf32, #tpu.memory_space<vmem>>, %arg4: memref<32x2xf32, #tpu.memory_space<vmem>>, %arg5: memref<32x1xf32, #tpu.memory_space<vmem>>, %arg6: memref<512x2xf32, #tpu.memory_space<vmem>>, %arg7: memref<2x512xf32, #tpu.memory_space<vmem>>, %arg8: memref<2x32xbf16, #tpu.memory_space<vmem>>, %arg9: memref<2x1xf32, #tpu.memory_space<vmem>>, %arg10: memref<2x18xbf16, #tpu.memory_space<vmem>>, %arg11: memref<2x1xf32, #tpu.memory_space<vmem>>, %arg12: memref<2x1xf32, #tpu.memory_space<vmem>>, %arg13: memref<2x1xf32, #tpu.memory_space<vmem>>, %arg14: memref<2x18xbf16, #tpu.memory_space<vmem>>, %arg15: memref<2x1xf32, #tpu.memory_space<vmem>>, %arg16: memref<1x2xbf16, #tpu.memory_space<vmem>>, %arg17: memref<1x1xf32, #tpu.memory_space<vmem>>, %arg18: memref<9x512xf32, #tpu.memory_space<vmem>>, %arg19: memref<32x512xf32, #tpu.memory_space<vmem>>) attributes {dimension_semantics = [#tpu.dimension_semantics<parallel>], iteration_bounds = array<i64: 1>, scalar_prefetch = 0 : i64, scratch_operands = 0 : i64, tpu.core_type = #tpu.core_type<tc>, window_params = [{transform_indices = @transform_0, window_bounds = array<i64: 32, 512>}, {pipeline_mode = #tpu.pipeline_mode<synchronous>, transform_indices = @transform_1, window_bounds = array<i64: 2, 32>}, {pipeline_mode = #tpu.pipeline_mode<synchronous>, transform_indices = @transform_2, window_bounds = array<i64: 2, 1>}, {pipeline_mode = #tpu.pipeline_mode<synchronous>, transform_indices = @transform_3, window_bounds = array<i64: 32, 2>}, {pipeline_mode = #tpu.pipeline_mode<synchronous>, transform_indices = @transform_4, window_bounds = array<i64: 32, 1>}, {pipeline_mode = #tpu.pipeline_mode<synchronous>, transform_indices = @transform_5, window_bounds = array<i64: 512, 2>}, {pipeline_mode = #tpu.pipeline_mode<synchronous>, transform_indices = @transform_6, window_bounds = array<i64: 2, 512>}, {pipeline_mode = #tpu.pipeline_mode<synchronous>, transform_indices = @transform_7, window_bounds = array<i64: 2, 32>}, {pipeline_mode = #tpu.pipeline_mode<synchronous>, transform_indices = @transform_8, window_bounds = array<i64: 2, 1>}, {pipeline_mode = #tpu.pipeline_mode<synchronous>, transform_indices = @transform_9, window_bounds = array<i64: 2, 18>}, {pipeline_mode = #tpu.pipeline_mode<synchronous>, transform_indices = @transform_10, window_bounds = array<i64: 2, 1>}, {pipeline_mode = #tpu.pipeline_mode<synchronous>, transform_indices = @transform_11, window_bounds = array<i64: 2, 1>}, {pipeline_mode = #tpu.pipeline_mode<synchronous>, transform_indices = @transform_12, window_bounds = array<i64: 2, 1>}, {pipeline_mode = #tpu.pipeline_mode<synchronous>, transform_indices = @transform_13, window_bounds = array<i64: 2, 18>}, {pipeline_mode = #tpu.pipeline_mode<synchronous>, transform_indices = @transform_14, window_bounds = array<i64: 2, 1>}, {pipeline_mode = #tpu.pipeline_mode<synchronous>, transform_indices = @transform_15, window_bounds = array<i64: 1, 2>}, {pipeline_mode = #tpu.pipeline_mode<synchronous>, transform_indices = @transform_16, window_bounds = array<i64: 1, 1>}, {pipeline_mode = #tpu.pipeline_mode<synchronous>, transform_indices = @transform_17, window_bounds = array<i64: 9, 512>}, {transform_indices = @transform_18, window_bounds = array<i64: 32, 512>}]} {
    %c0 = arith.constant 0 : index
    %c0_0 = arith.constant 0 : index
    %0 = vector.load %arg1[%c0, %c0_0] : memref<32x512xf32, #tpu.memory_space<vmem>>, vector<32x512xf32>
    %c0_1 = arith.constant 0 : index
    %c0_2 = arith.constant 0 : index
    %1 = vector.load %arg6[%c0_1, %c0_2] : memref<512x2xf32, #tpu.memory_space<vmem>>, vector<512x2xf32>
    %cst = arith.constant dense<0.000000e+00> : vector<32x2xf32>
    %2 = tpu.matmul %0, %1, %cst {dimension_numbers = #tpu.dot_dimension_numbers<[1], [0], [0], [1], [0, 0, 1, 1], [], []>} : vector<32x512xf32>, vector<512x2xf32>, vector<32x2xf32> -> vector<32x2xf32>
    %c0_3 = arith.constant 0 : index
    %c0_4 = arith.constant 0 : index
    %3 = vector.load %arg2[%c0_3, %c0_4] : memref<2x32xf32, #tpu.memory_space<vmem>>, vector<2x32xf32>
    %cst_5 = arith.constant dense<0.000000e+00> : vector<2x2xf32>
    %4 = tpu.matmul %3, %2, %cst_5 {dimension_numbers = #tpu.dot_dimension_numbers<[1], [0], [0], [1], [0, 0, 1, 1], [], []>} : vector<2x32xf32>, vector<32x2xf32>, vector<2x2xf32> -> vector<2x2xf32>
    %c0_6 = arith.constant 0 : index
    %c0_7 = arith.constant 0 : index
    %5 = vector.load %arg3[%c0_6, %c0_7] : memref<2x1xf32, #tpu.memory_space<vmem>>, vector<2x1xf32>
    %6 = vector.broadcast %5 : vector<2x1xf32> to vector<2x2xf32>
    %7 = arith.addf %4, %6 : vector<2x2xf32>
    %cst_8 = arith.constant 0.000000e+00 : f32
    %8 = vector.broadcast %cst_8 : f32 to vector<2x2xf32>
    %9 = arith.maximumf %7, %8 : vector<2x2xf32>
    %c0_9 = arith.constant 0 : index
    %c0_10 = arith.constant 0 : index
    %10 = vector.load %arg4[%c0_9, %c0_10] : memref<32x2xf32, #tpu.memory_space<vmem>>, vector<32x2xf32>
    %cst_11 = arith.constant dense<0.000000e+00> : vector<32x2xf32>
    %11 = tpu.matmul %10, %9, %cst_11 {dimension_numbers = #tpu.dot_dimension_numbers<[1], [0], [0], [1], [0, 0, 1, 1], [], []>} : vector<32x2xf32>, vector<2x2xf32>, vector<32x2xf32> -> vector<32x2xf32>
    %c0_12 = arith.constant 0 : index
    %c0_13 = arith.constant 0 : index
    %12 = vector.load %arg5[%c0_12, %c0_13] : memref<32x1xf32, #tpu.memory_space<vmem>>, vector<32x1xf32>
    %13 = vector.broadcast %12 : vector<32x1xf32> to vector<32x2xf32>
    %14 = arith.addf %11, %13 : vector<32x2xf32>
    %c0_14 = arith.constant 0 : index
    %c0_15 = arith.constant 0 : index
    %15 = vector.load %arg7[%c0_14, %c0_15] : memref<2x512xf32, #tpu.memory_space<vmem>>, vector<2x512xf32>
    %cst_16 = arith.constant dense<0.000000e+00> : vector<32x512xf32>
    %16 = tpu.matmul %14, %15, %cst_16 {dimension_numbers = #tpu.dot_dimension_numbers<[1], [0], [0], [1], [0, 0, 1, 1], [], []>} : vector<32x2xf32>, vector<2x512xf32>, vector<32x512xf32> -> vector<32x512xf32>
    %17 = arith.truncf %0 : vector<32x512xf32> to vector<32x512xbf16>
    %c0_17 = arith.constant 0 : index
    %c0_18 = arith.constant 0 : index
    %18 = vector.load %arg8[%c0_17, %c0_18] : memref<2x32xbf16, #tpu.memory_space<vmem>>, vector<2x32xbf16>
    %cst_19 = arith.constant dense<0.000000e+00> : vector<2x512xf32>
    %19 = tpu.matmul %18, %17, %cst_19 {dimension_numbers = #tpu.dot_dimension_numbers<[1], [0], [0], [1], [0, 0, 1, 1], [], []>} : vector<2x32xbf16>, vector<32x512xbf16>, vector<2x512xf32> -> vector<2x512xf32>
    %c0_20 = arith.constant 0 : index
    %c0_21 = arith.constant 0 : index
    %20 = vector.load %arg9[%c0_20, %c0_21] : memref<2x1xf32, #tpu.memory_space<vmem>>, vector<2x1xf32>
    %21 = vector.broadcast %20 : vector<2x1xf32> to vector<2x512xf32>
    %22 = arith.addf %19, %21 : vector<2x512xf32>
    %c34_i32 = arith.constant 34 : i32
    %23 = tpu.dynamic_rotate %22 by %c34_i32 dim 1 : vector<2x512xf32>, i32 -> vector<2x512xf32>
    %c0_22 = arith.constant 0 : index
    %c0_23 = arith.constant 0 : index
    %24 = vector.load %arg18[%c0_22, %c0_23] : memref<9x512xf32, #tpu.memory_space<vmem>>, vector<1x512xf32>
    %25 = vector.broadcast %24 : vector<1x512xf32> to vector<2x512xf32>
    %26 = arith.mulf %23, %25 : vector<2x512xf32>
    %c32_i32 = arith.constant 32 : i32
    %27 = tpu.dynamic_rotate %22 by %c32_i32 dim 1 : vector<2x512xf32>, i32 -> vector<2x512xf32>
    %c1 = arith.constant 1 : index
    %c0_24 = arith.constant 0 : index
    %28 = vector.load %arg18[%c1, %c0_24] : memref<9x512xf32, #tpu.memory_space<vmem>>, vector<1x512xf32>
    %29 = vector.broadcast %28 : vector<1x512xf32> to vector<2x512xf32>
    %30 = arith.mulf %27, %29 : vector<2x512xf32>
    %c30_i32 = arith.constant 30 : i32
    %31 = tpu.dynamic_rotate %22 by %c30_i32 dim 1 : vector<2x512xf32>, i32 -> vector<2x512xf32>
    %c2 = arith.constant 2 : index
    %c0_25 = arith.constant 0 : index
    %32 = vector.load %arg18[%c2, %c0_25] : memref<9x512xf32, #tpu.memory_space<vmem>>, vector<1x512xf32>
    %33 = vector.broadcast %32 : vector<1x512xf32> to vector<2x512xf32>
    %34 = arith.mulf %31, %33 : vector<2x512xf32>
    %c2_i32 = arith.constant 2 : i32
    %35 = tpu.dynamic_rotate %22 by %c2_i32 dim 1 : vector<2x512xf32>, i32 -> vector<2x512xf32>
    %c3 = arith.constant 3 : index
    %c0_26 = arith.constant 0 : index
    %36 = vector.load %arg18[%c3, %c0_26] : memref<9x512xf32, #tpu.memory_space<vmem>>, vector<1x512xf32>
    %37 = vector.broadcast %36 : vector<1x512xf32> to vector<2x512xf32>
    %38 = arith.mulf %35, %37 : vector<2x512xf32>
    %c510_i32 = arith.constant 510 : i32
    %39 = tpu.dynamic_rotate %22 by %c510_i32 dim 1 : vector<2x512xf32>, i32 -> vector<2x512xf32>
    %c5 = arith.constant 5 : index
    %c0_27 = arith.constant 0 : index
    %40 = vector.load %arg18[%c5, %c0_27] : memref<9x512xf32, #tpu.memory_space<vmem>>, vector<1x512xf32>
    %41 = vector.broadcast %40 : vector<1x512xf32> to vector<2x512xf32>
    %42 = arith.mulf %39, %41 : vector<2x512xf32>
    %c482_i32 = arith.constant 482 : i32
    %43 = tpu.dynamic_rotate %22 by %c482_i32 dim 1 : vector<2x512xf32>, i32 -> vector<2x512xf32>
    %c6 = arith.constant 6 : index
    %c0_28 = arith.constant 0 : index
    %44 = vector.load %arg18[%c6, %c0_28] : memref<9x512xf32, #tpu.memory_space<vmem>>, vector<1x512xf32>
    %45 = vector.broadcast %44 : vector<1x512xf32> to vector<2x512xf32>
    %46 = arith.mulf %43, %45 : vector<2x512xf32>
    %c480_i32 = arith.constant 480 : i32
    %47 = tpu.dynamic_rotate %22 by %c480_i32 dim 1 : vector<2x512xf32>, i32 -> vector<2x512xf32>
    %c7 = arith.constant 7 : index
    %c0_29 = arith.constant 0 : index
    %48 = vector.load %arg18[%c7, %c0_29] : memref<9x512xf32, #tpu.memory_space<vmem>>, vector<1x512xf32>
    %49 = vector.broadcast %48 : vector<1x512xf32> to vector<2x512xf32>
    %50 = arith.mulf %47, %49 : vector<2x512xf32>
    %c478_i32 = arith.constant 478 : i32
    %51 = tpu.dynamic_rotate %22 by %c478_i32 dim 1 : vector<2x512xf32>, i32 -> vector<2x512xf32>
    %c8 = arith.constant 8 : index
    %c0_30 = arith.constant 0 : index
    %52 = vector.load %arg18[%c8, %c0_30] : memref<9x512xf32, #tpu.memory_space<vmem>>, vector<1x512xf32>
    %53 = vector.broadcast %52 : vector<1x512xf32> to vector<2x512xf32>
    %54 = arith.mulf %51, %53 : vector<2x512xf32>
    %55 = tpu.concatenate %26, %30, %34, %38, %22, %42, %46, %50, %54 in 0 : vector<2x512xf32>, vector<2x512xf32>, vector<2x512xf32>, vector<2x512xf32>, vector<2x512xf32>, vector<2x512xf32>, vector<2x512xf32>, vector<2x512xf32>, vector<2x512xf32> -> vector<18x512xf32>
    %56 = arith.truncf %55 : vector<18x512xf32> to vector<18x512xbf16>
    %c0_31 = arith.constant 0 : index
    %c0_32 = arith.constant 0 : index
    %57 = vector.load %arg10[%c0_31, %c0_32] : memref<2x18xbf16, #tpu.memory_space<vmem>>, vector<2x18xbf16>
    %cst_33 = arith.constant dense<0.000000e+00> : vector<2x512xf32>
    %58 = tpu.matmul %57, %56, %cst_33 {dimension_numbers = #tpu.dot_dimension_numbers<[1], [0], [0], [1], [0, 0, 1, 1], [], []>} : vector<2x18xbf16>, vector<18x512xbf16>, vector<2x512xf32> -> vector<2x512xf32>
    %c0_34 = arith.constant 0 : index
    %c0_35 = arith.constant 0 : index
    %59 = vector.load %arg11[%c0_34, %c0_35] : memref<2x1xf32, #tpu.memory_space<vmem>>, vector<2x1xf32>
    %60 = vector.broadcast %59 : vector<2x1xf32> to vector<2x512xf32>
    %61 = arith.addf %58, %60 : vector<2x512xf32>
    %cst_36 = arith.constant 0.000000e+00 : f32
    %62 = vector.broadcast %cst_36 : f32 to vector<2x512xf32>
    %63 = arith.maximumf %61, %62 : vector<2x512xf32>
    %c0_37 = arith.constant 0 : index
    %c0_38 = arith.constant 0 : index
    %64 = vector.load %arg12[%c0_37, %c0_38] : memref<2x1xf32, #tpu.memory_space<vmem>>, vector<2x1xf32>
    %65 = vector.broadcast %64 : vector<2x1xf32> to vector<2x512xf32>
    %66 = arith.mulf %63, %65 : vector<2x512xf32>
    %c0_39 = arith.constant 0 : index
    %c0_40 = arith.constant 0 : index
    %67 = vector.load %arg13[%c0_39, %c0_40] : memref<2x1xf32, #tpu.memory_space<vmem>>, vector<2x1xf32>
    %68 = vector.broadcast %67 : vector<2x1xf32> to vector<2x512xf32>
    %69 = arith.addf %66, %68 : vector<2x512xf32>
    %c34_i32_41 = arith.constant 34 : i32
    %70 = tpu.dynamic_rotate %69 by %c34_i32_41 dim 1 : vector<2x512xf32>, i32 -> vector<2x512xf32>
    %c0_42 = arith.constant 0 : index
    %c0_43 = arith.constant 0 : index
    %71 = vector.load %arg18[%c0_42, %c0_43] : memref<9x512xf32, #tpu.memory_space<vmem>>, vector<1x512xf32>
    %72 = vector.broadcast %71 : vector<1x512xf32> to vector<2x512xf32>
    %73 = arith.mulf %70, %72 : vector<2x512xf32>
    %c32_i32_44 = arith.constant 32 : i32
    %74 = tpu.dynamic_rotate %69 by %c32_i32_44 dim 1 : vector<2x512xf32>, i32 -> vector<2x512xf32>
    %c1_45 = arith.constant 1 : index
    %c0_46 = arith.constant 0 : index
    %75 = vector.load %arg18[%c1_45, %c0_46] : memref<9x512xf32, #tpu.memory_space<vmem>>, vector<1x512xf32>
    %76 = vector.broadcast %75 : vector<1x512xf32> to vector<2x512xf32>
    %77 = arith.mulf %74, %76 : vector<2x512xf32>
    %c30_i32_47 = arith.constant 30 : i32
    %78 = tpu.dynamic_rotate %69 by %c30_i32_47 dim 1 : vector<2x512xf32>, i32 -> vector<2x512xf32>
    %c2_48 = arith.constant 2 : index
    %c0_49 = arith.constant 0 : index
    %79 = vector.load %arg18[%c2_48, %c0_49] : memref<9x512xf32, #tpu.memory_space<vmem>>, vector<1x512xf32>
    %80 = vector.broadcast %79 : vector<1x512xf32> to vector<2x512xf32>
    %81 = arith.mulf %78, %80 : vector<2x512xf32>
    %c2_i32_50 = arith.constant 2 : i32
    %82 = tpu.dynamic_rotate %69 by %c2_i32_50 dim 1 : vector<2x512xf32>, i32 -> vector<2x512xf32>
    %c3_51 = arith.constant 3 : index
    %c0_52 = arith.constant 0 : index
    %83 = vector.load %arg18[%c3_51, %c0_52] : memref<9x512xf32, #tpu.memory_space<vmem>>, vector<1x512xf32>
    %84 = vector.broadcast %83 : vector<1x512xf32> to vector<2x512xf32>
    %85 = arith.mulf %82, %84 : vector<2x512xf32>
    %c510_i32_53 = arith.constant 510 : i32
    %86 = tpu.dynamic_rotate %69 by %c510_i32_53 dim 1 : vector<2x512xf32>, i32 -> vector<2x512xf32>
    %c5_54 = arith.constant 5 : index
    %c0_55 = arith.constant 0 : index
    %87 = vector.load %arg18[%c5_54, %c0_55] : memref<9x512xf32, #tpu.memory_space<vmem>>, vector<1x512xf32>
    %88 = vector.broadcast %87 : vector<1x512xf32> to vector<2x512xf32>
    %89 = arith.mulf %86, %88 : vector<2x512xf32>
    %c482_i32_56 = arith.constant 482 : i32
    %90 = tpu.dynamic_rotate %69 by %c482_i32_56 dim 1 : vector<2x512xf32>, i32 -> vector<2x512xf32>
    %c6_57 = arith.constant 6 : index
    %c0_58 = arith.constant 0 : index
    %91 = vector.load %arg18[%c6_57, %c0_58] : memref<9x512xf32, #tpu.memory_space<vmem>>, vector<1x512xf32>
    %92 = vector.broadcast %91 : vector<1x512xf32> to vector<2x512xf32>
    %93 = arith.mulf %90, %92 : vector<2x512xf32>
    %c480_i32_59 = arith.constant 480 : i32
    %94 = tpu.dynamic_rotate %69 by %c480_i32_59 dim 1 : vector<2x512xf32>, i32 -> vector<2x512xf32>
    %c7_60 = arith.constant 7 : index
    %c0_61 = arith.constant 0 : index
    %95 = vector.load %arg18[%c7_60, %c0_61] : memref<9x512xf32, #tpu.memory_space<vmem>>, vector<1x512xf32>
    %96 = vector.broadcast %95 : vector<1x512xf32> to vector<2x512xf32>
    %97 = arith.mulf %94, %96 : vector<2x512xf32>
    %c478_i32_62 = arith.constant 478 : i32
    %98 = tpu.dynamic_rotate %69 by %c478_i32_62 dim 1 : vector<2x512xf32>, i32 -> vector<2x512xf32>
    %c8_63 = arith.constant 8 : index
    %c0_64 = arith.constant 0 : index
    %99 = vector.load %arg18[%c8_63, %c0_64] : memref<9x512xf32, #tpu.memory_space<vmem>>, vector<1x512xf32>
    %100 = vector.broadcast %99 : vector<1x512xf32> to vector<2x512xf32>
    %101 = arith.mulf %98, %100 : vector<2x512xf32>
    %102 = tpu.concatenate %73, %77, %81, %85, %69, %89, %93, %97, %101 in 0 : vector<2x512xf32>, vector<2x512xf32>, vector<2x512xf32>, vector<2x512xf32>, vector<2x512xf32>, vector<2x512xf32>, vector<2x512xf32>, vector<2x512xf32>, vector<2x512xf32> -> vector<18x512xf32>
    %103 = arith.truncf %102 : vector<18x512xf32> to vector<18x512xbf16>
    %c0_65 = arith.constant 0 : index
    %c0_66 = arith.constant 0 : index
    %104 = vector.load %arg14[%c0_65, %c0_66] : memref<2x18xbf16, #tpu.memory_space<vmem>>, vector<2x18xbf16>
    %cst_67 = arith.constant dense<0.000000e+00> : vector<2x512xf32>
    %105 = tpu.matmul %104, %103, %cst_67 {dimension_numbers = #tpu.dot_dimension_numbers<[1], [0], [0], [1], [0, 0, 1, 1], [], []>} : vector<2x18xbf16>, vector<18x512xbf16>, vector<2x512xf32> -> vector<2x512xf32>
    %c0_68 = arith.constant 0 : index
    %c0_69 = arith.constant 0 : index
    %106 = vector.load %arg15[%c0_68, %c0_69] : memref<2x1xf32, #tpu.memory_space<vmem>>, vector<2x1xf32>
    %107 = vector.broadcast %106 : vector<2x1xf32> to vector<2x512xf32>
    %108 = arith.addf %105, %107 : vector<2x512xf32>
    %cst_70 = arith.constant 0.000000e+00 : f32
    %109 = vector.broadcast %cst_70 : f32 to vector<2x512xf32>
    %110 = arith.maximumf %108, %109 : vector<2x512xf32>
    %c0_71 = arith.constant 0 : index
    %c0_72 = arith.constant 0 : index
    %111 = vector.load %arg16[%c0_71, %c0_72] : memref<1x2xbf16, #tpu.memory_space<vmem>>, vector<1x2xbf16>
    %112 = arith.truncf %110 : vector<2x512xf32> to vector<2x512xbf16>
    %cst_73 = arith.constant dense<0.000000e+00> : vector<1x512xf32>
    %113 = tpu.matmul %111, %112, %cst_73 {dimension_numbers = #tpu.dot_dimension_numbers<[1], [0], [0], [1], [0, 0, 1, 1], [], []>} : vector<1x2xbf16>, vector<2x512xbf16>, vector<1x512xf32> -> vector<1x512xf32>
    %c0_74 = arith.constant 0 : index
    %c0_75 = arith.constant 0 : index
    %114 = vector.load %arg17[%c0_74, %c0_75] : memref<1x1xf32, #tpu.memory_space<vmem>>, vector<1x1xf32>
    %115 = vector.broadcast %114 : vector<1x1xf32> to vector<1x512xf32>
    %116 = arith.addf %113, %115 : vector<1x512xf32>
    %117 = vector.broadcast %116 : vector<1x512xf32> to vector<32x512xf32>
    %118 = arith.addf %117, %16 : vector<32x512xf32>
    %119 = arith.negf %118 : vector<32x512xf32>
    %120 = math.exp %119 : vector<32x512xf32>
    %cst_76 = arith.constant 1.000000e+00 : f32
    %121 = vector.broadcast %cst_76 : f32 to vector<32x512xf32>
    %122 = arith.addf %121, %120 : vector<32x512xf32>
    %123 = arith.divf %121, %122 : vector<32x512xf32>
    %cst_77 = arith.constant 1.000000e+00 : f32
    %124 = vector.broadcast %cst_77 : f32 to vector<32x512xf32>
    %125 = arith.addf %124, %123 : vector<32x512xf32>
    %126 = arith.mulf %125, %0 : vector<32x512xf32>
    %c0_78 = arith.constant 0 : index
    %c0_79 = arith.constant 0 : index
    %127 = vector.load %arg19[%c0_78, %c0_79] : memref<32x512xf32, #tpu.memory_space<vmem>>, vector<32x512xf32>
    tpu.vector_store %arg19[%c0_78, %c0_79], %126 {strides = array<i32>} : memref<32x512xf32, #tpu.memory_space<vmem>>, vector<32x512xf32>,
    return
  }
  func.func @transform_0(%arg0: i32) -> (i32, i32) {
    %c0_i32 = arith.constant 0 : i32
    %c0_i32_0 = arith.constant 0 : i32
    return %c0_i32, %arg0 : i32, i32
  }
  func.func @transform_1(%arg0: i32) -> (i32, i32) {
    %c0_i32 = arith.constant 0 : i32
    %c0_i32_0 = arith.constant 0 : i32
    %c0_i32_1 = arith.constant 0 : i32
    return %c0_i32, %c0_i32_0 : i32, i32
  }
  func.func @transform_2(%arg0: i32) -> (i32, i32) {
    %c0_i32 = arith.constant 0 : i32
    %c0_i32_0 = arith.constant 0 : i32
    %c0_i32_1 = arith.constant 0 : i32
    return %c0_i32, %c0_i32_0 : i32, i32
  }
  func.func @transform_3(%arg0: i32) -> (i32, i32) {
    %c0_i32 = arith.constant 0 : i32
    %c0_i32_0 = arith.constant 0 : i32
    %c0_i32_1 = arith.constant 0 : i32
    return %c0_i32, %c0_i32_0 : i32, i32
  }
  func.func @transform_4(%arg0: i32) -> (i32, i32) {
    %c0_i32 = arith.constant 0 : i32
    %c0_i32_0 = arith.constant 0 : i32
    %c0_i32_1 = arith.constant 0 : i32
    return %c0_i32, %c0_i32_0 : i32, i32
  }
  func.func @transform_5(%arg0: i32) -> (i32, i32) {
    %c0_i32 = arith.constant 0 : i32
    %c0_i32_0 = arith.constant 0 : i32
    %c0_i32_1 = arith.constant 0 : i32
    return %c0_i32, %c0_i32_0 : i32, i32
  }
  func.func @transform_6(%arg0: i32) -> (i32, i32) {
    %c0_i32 = arith.constant 0 : i32
    %c0_i32_0 = arith.constant 0 : i32
    %c0_i32_1 = arith.constant 0 : i32
    return %c0_i32, %c0_i32_0 : i32, i32
  }
  func.func @transform_7(%arg0: i32) -> (i32, i32) {
    %c0_i32 = arith.constant 0 : i32
    %c0_i32_0 = arith.constant 0 : i32
    %c0_i32_1 = arith.constant 0 : i32
    return %c0_i32, %c0_i32_0 : i32, i32
  }
  func.func @transform_8(%arg0: i32) -> (i32, i32) {
    %c0_i32 = arith.constant 0 : i32
    %c0_i32_0 = arith.constant 0 : i32
    %c0_i32_1 = arith.constant 0 : i32
    return %c0_i32, %c0_i32_0 : i32, i32
  }
  func.func @transform_9(%arg0: i32) -> (i32, i32) {
    %c0_i32 = arith.constant 0 : i32
    %c0_i32_0 = arith.constant 0 : i32
    %c0_i32_1 = arith.constant 0 : i32
    return %c0_i32, %c0_i32_0 : i32, i32
  }
  func.func @transform_10(%arg0: i32) -> (i32, i32) {
    %c0_i32 = arith.constant 0 : i32
    %c0_i32_0 = arith.constant 0 : i32
    %c0_i32_1 = arith.constant 0 : i32
    return %c0_i32, %c0_i32_0 : i32, i32
  }
  func.func @transform_11(%arg0: i32) -> (i32, i32) {
    %c0_i32 = arith.constant 0 : i32
    %c0_i32_0 = arith.constant 0 : i32
    %c0_i32_1 = arith.constant 0 : i32
    return %c0_i32, %c0_i32_0 : i32, i32
  }
  func.func @transform_12(%arg0: i32) -> (i32, i32) {
    %c0_i32 = arith.constant 0 : i32
    %c0_i32_0 = arith.constant 0 : i32
    %c0_i32_1 = arith.constant 0 : i32
    return %c0_i32, %c0_i32_0 : i32, i32
  }
  func.func @transform_13(%arg0: i32) -> (i32, i32) {
    %c0_i32 = arith.constant 0 : i32
    %c0_i32_0 = arith.constant 0 : i32
    %c0_i32_1 = arith.constant 0 : i32
    return %c0_i32, %c0_i32_0 : i32, i32
  }
  func.func @transform_14(%arg0: i32) -> (i32, i32) {
    %c0_i32 = arith.constant 0 : i32
    %c0_i32_0 = arith.constant 0 : i32
    %c0_i32_1 = arith.constant 0 : i32
    return %c0_i32, %c0_i32_0 : i32, i32
  }
  func.func @transform_15(%arg0: i32) -> (i32, i32) {
    %c0_i32 = arith.constant 0 : i32
    %c0_i32_0 = arith.constant 0 : i32
    %c0_i32_1 = arith.constant 0 : i32
    return %c0_i32, %c0_i32_0 : i32, i32
  }
  func.func @transform_16(%arg0: i32) -> (i32, i32) {
    %c0_i32 = arith.constant 0 : i32
    %c0_i32_0 = arith.constant 0 : i32
    %c0_i32_1 = arith.constant 0 : i32
    return %c0_i32, %c0_i32_0 : i32, i32
  }
  func.func @transform_17(%arg0: i32) -> (i32, i32) {
    %c0_i32 = arith.constant 0 : i32
    %c0_i32_0 = arith.constant 0 : i32
    %c0_i32_1 = arith.constant 0 : i32
    return %c0_i32, %c0_i32_0 : i32, i32
  }
  func.func @transform_18(%arg0: i32) -> (i32, i32) {
    %c0_i32 = arith.constant 0 : i32
    %c0_i32_0 = arith.constant 0 : i32
    return %c0_i32, %arg0 : i32, i32
  }
}

</mosaic_0001>

<llo_original>
// kernel: bam_pallas.1
$region0: #{bam_pallas.1}
  #allocation0 [shape = 'u32[]', space=smem, size = 0x4, offset = 0x4, fixed_abs, tag = 'smem constant byte address 0x4 - core index']
  #allocation1 [shape = 'u32[144,128]{1,0:T(1,128)}', space=vmem, size = 0x12000, scoped, tag = 'internal scratch']
  #allocation2 [shape = 'f32[1,1]{1,0:T(1,128)S(1)}', space=vmem, size = 0x200, scoped, tag = 'scoped memory for bam_pallas.1']
  %s0 = inlined_call_operand.vmem [shape: f32[32,512], index: 0, kind: input, shape index: {}]
  %s1 = inlined_call_operand.vmem [shape: f32[2,32], index: 1, kind: input, shape index: {}]
  %s2 = inlined_call_operand.vmem [shape: f32[2,1], index: 2, kind: input, shape index: {}]
  %s3 = inlined_call_operand.vmem [shape: f32[32,2], index: 3, kind: input, shape index: {}]
  %s4 = inlined_call_operand.vmem [shape: f32[32,1], index: 4, kind: input, shape index: {}]
  %s5 = inlined_call_operand.vmem [shape: f32[512,2], index: 5, kind: input, shape index: {}]
  %s6 = inlined_call_operand.vmem [shape: f32[2,512], index: 6, kind: input, shape index: {}]
  %s7 = inlined_call_operand.vmem [shape: bf16[2,32], index: 7, kind: input, shape index: {}]
  %s8 = inlined_call_operand.vmem [shape: f32[2,1], index: 8, kind: input, shape index: {}]
  %s9 = inlined_call_operand.vmem [shape: bf16[2,18], index: 9, kind: input, shape index: {}]
  %s10 = inlined_call_operand.vmem [shape: f32[2,1], index: 10, kind: input, shape index: {}]
  %s11 = inlined_call_operand.vmem [shape: f32[2,1], index: 11, kind: input, shape index: {}]
  %s12 = inlined_call_operand.vmem [shape: f32[2,1], index: 12, kind: input, shape index: {}]
  %s13 = inlined_call_operand.vmem [shape: bf16[2,18], index: 13, kind: input, shape index: {}]
  %s14 = inlined_call_operand.vmem [shape: f32[2,1], index: 14, kind: input, shape index: {}]
  %s15 = inlined_call_operand.vmem [shape: bf16[1,2], index: 15, kind: input, shape index: {}]
  %s16 = inlined_call_operand.<no memory space> [shape: f32[1,1], index: 16, kind: input, shape index: {}]
  %s17 = inlined_call_operand.vmem [shape: f32[9,512], index: 17, kind: input, shape index: {}]
  %s18 = inlined_call_operand.vmem [shape: f32[32,512], index: 18, kind: output, shape index: {}]
  %s19 = sld [smem:[#allocation0]]
  $region82: #{bam_pallas.1} parent=0
    _
  %s21 = ssub.s32 1, %s19
  %s22 = scalar_select 0, %s21, %s19
  %v23 = vstv %s16
  %24 = vst [vmem:[#allocation2] sm:$0x1] %v23
  // Predicated region
  $region2: #{bam_pallas.1} parent=0 // pred_check
    _
  $region3: #{bam_pallas.1} parent=0 // pred_check_branch
    %26 = sbr.rel (0) target = $region5
  $region4: #{bam_pallas.1} parent=0 // pred_region
    _
  $region5: #{bam_pallas.1} parent=0 // pred_fallthru
    _
  // Predicated region
  $region6: #{bam_pallas.1} parent=0 // pred_check
    _
  $region7: #{bam_pallas.1} parent=0 // pred_check_branch
    %28 = sbr.rel (0) target = $region9
  $region8: #{bam_pallas.1} parent=0 // pred_region
    _
  $region9: #{bam_pallas.1} parent=0 // pred_fallthru
    _
  // Predicated region
  $region10: #{bam_pallas.1} parent=0 // pred_check
    _
  $region11: #{bam_pallas.1} parent=0 // pred_check_branch
    %30 = sbr.rel (0) target = $region13
  $region12: #{bam_pallas.1} parent=0 // pred_region
    _
  $region13: #{bam_pallas.1} parent=0 // pred_fallthru
    _
  // Predicated region
  $region14: #{bam_pallas.1} parent=0 // pred_check
    _
  $region15: #{bam_pallas.1} parent=0 // pred_check_branch
    %32 = sbr.rel (0) target = $region17
  $region16: #{bam_pallas.1} parent=0 // pred_region
    _
  $region17: #{bam_pallas.1} parent=0 // pred_fallthru
    _
  // Predicated region
  $region18: #{bam_pallas.1} parent=0 // pred_check
    _
  $region19: #{bam_pallas.1} parent=0 // pred_check_branch
    %34 = sbr.rel (0) target = $region21
  $region20: #{bam_pallas.1} parent=0 // pred_region
    _
  $region21: #{bam_pallas.1} parent=0 // pred_fallthru
    _
  // Predicated region
  $region22: #{bam_pallas.1} parent=0 // pred_check
    _
  $region23: #{bam_pallas.1} parent=0 // pred_check_branch
    %36 = sbr.rel (0) target = $region25
  $region24: #{bam_pallas.1} parent=0 // pred_region
    _
  $region25: #{bam_pallas.1} parent=0 // pred_fallthru
    _
  // Predicated region
  $region26: #{bam_pallas.1} parent=0 // pred_check
    _
  $region27: #{bam_pallas.1} parent=0 // pred_check_branch
    %38 = sbr.rel (0) target = $region29
  $region28: #{bam_pallas.1} parent=0 // pred_region
    _
  $region29: #{bam_pallas.1} parent=0 // pred_fallthru
    _
  // Predicated region
  $region30: #{bam_pallas.1} parent=0 // pred_check
    _
  $region31: #{bam_pallas.1} parent=0 // pred_check_branch
    %40 = sbr.rel (0) target = $region33
  $region32: #{bam_pallas.1} parent=0 // pred_region
    _
  $region33: #{bam_pallas.1} parent=0 // pred_fallthru
    _
  // Predicated region
  $region34: #{bam_pallas.1} parent=0 // pred_check
    _
  $region35: #{bam_pallas.1} parent=0 // pred_check_branch
    %42 = sbr.rel (0) target = $region37
  $region36: #{bam_pallas.1} parent=0 // pred_region
    _
  $region37: #{bam_pallas.1} parent=0 // pred_fallthru
    _
  // Predicated region
  $region38: #{bam_pallas.1} parent=0 // pred_check
    _
  $region39: #{bam_pallas.1} parent=0 // pred_check_branch
    %44 = sbr.rel (0) target = $region41
  $region40: #{bam_pallas.1} parent=0 // pred_region
    _
  $region41: #{bam_pallas.1} parent=0 // pred_fallthru
    _
  // Predicated region
  $region42: #{bam_pallas.1} parent=0 // pred_check
    _
  $region43: #{bam_pallas.1} parent=0 // pred_check_branch
    %46 = sbr.rel (0) target = $region45
  $region44: #{bam_pallas.1} parent=0 // pred_region
    _
  $region45: #{bam_pallas.1} parent=0 // pred_fallthru
    _
  // Predicated region
  $region46: #{bam_pallas.1} parent=0 // pred_check
    _
  $region47: #{bam_pallas.1} parent=0 // pred_check_branch
    %48 = sbr.rel (0) target = $region49
  $region48: #{bam_pallas.1} parent=0 // pred_region
    _
  $region49: #{bam_pallas.1} parent=0 // pred_fallthru
    _
  // Predicated region
  $region50: #{bam_pallas.1} parent=0 // pred_check
    _
  $region51: #{bam_pallas.1} parent=0 // pred_check_branch
    %50 = sbr.rel (0) target = $region53
  $region52: #{bam_pallas.1} parent=0 // pred_region
    _
  $region53: #{bam_pallas.1} parent=0 // pred_fallthru
    _
  // Predicated region
  $region54: #{bam_pallas.1} parent=0 // pred_check
    _
  $region55: #{bam_pallas.1} parent=0 // pred_check_branch
    %52 = sbr.rel (0) target = $region57
  $region56: #{bam_pallas.1} parent=0 // pred_region
    _
  $region57: #{bam_pallas.1} parent=0 // pred_fallthru
    _
  // Predicated region
  $region58: #{bam_pallas.1} parent=0 // pred_check
    _
  $region59: #{bam_pallas.1} parent=0 // pred_check_branch
    %54 = sbr.rel (0) target = $region61
  $region60: #{bam_pallas.1} parent=0 // pred_region
    _
  $region61: #{bam_pallas.1} parent=0 // pred_fallthru
    _
  // Predicated region
  $region62: #{bam_pallas.1} parent=0 // pred_check
    _
  $region63: #{bam_pallas.1} parent=0 // pred_check_branch
    %56 = sbr.rel (0) target = $region65
  $region64: #{bam_pallas.1} parent=0 // pred_region
    _
  $region65: #{bam_pallas.1} parent=0 // pred_fallthru
    _
  // Predicated region
  $region66: #{bam_pallas.1} parent=0 // pred_check
    _
  $region67: #{bam_pallas.1} parent=0 // pred_check_branch
    %58 = sbr.rel (0) target = $region69
  $region68: #{bam_pallas.1} parent=0 // pred_region
    _
  $region69: #{bam_pallas.1} parent=0 // pred_fallthru
    _
  // Predicated region
  $region70: #{bam_pallas.1} parent=0 // pred_check
    _
  $region71: #{bam_pallas.1} parent=0 // pred_check_branch
    %60 = sbr.rel (0) target = $region73
  $region72: #{bam_pallas.1} parent=0 // pred_region
    _
  $region73: #{bam_pallas.1} parent=0 // pred_fallthru
    _
  %v62 = vld [vmem:[%s0] sm:$0xff]
  %v63 = vld [vmem:[%s0 + $0x8] sm:$0xff]
  %v64 = vld [vmem:[%s0 + $0x10] sm:$0xff]
  %v65 = vld [vmem:[%s0 + $0x18] sm:$0xff]
  %v66 = vld [vmem:[%s0 + $0x20] sm:$0xff]
  %v67 = vld [vmem:[%s0 + $0x28] sm:$0xff]
  %v68 = vld [vmem:[%s0 + $0x30] sm:$0xff]
  %v69 = vld [vmem:[%s0 + $0x38] sm:$0xff]
  %v70 = vld [vmem:[%s0 + $0x40] sm:$0xff]
  %v71 = vld [vmem:[%s0 + $0x48] sm:$0xff]
  %v72 = vld [vmem:[%s0 + $0x50] sm:$0xff]
  %v73 = vld [vmem:[%s0 + $0x58] sm:$0xff]
  %v74 = vld [vmem:[%s0 + $0x60] sm:$0xff]
  %v75 = vld [vmem:[%s0 + $0x68] sm:$0xff]
  %v76 = vld [vmem:[%s0 + $0x70] sm:$0xff]
  %v77 = vld [vmem:[%s0 + $0x78] sm:$0xff]
  %v78 = vld [vmem:[%s5] sm:$0xff]
  %v79 = vld [vmem:[%s5 + $0x8] sm:$0xff]
  %v80 = vld [vmem:[%s5 + $0x10] sm:$0xff]
  %v81 = vld [vmem:[%s5 + $0x18] sm:$0xff]
  %v82 = vld [vmem:[%s5 + $0x20] sm:$0xff]
  %v83 = vld [vmem:[%s5 + $0x28] sm:$0xff]
  %v84 = vld [vmem:[%s5 + $0x30] sm:$0xff]
  %v85 = vld [vmem:[%s5 + $0x38] sm:$0xff]
  %v86 = vld [vmem:[%s5 + $0x40] sm:$0xff]
  %v87 = vld [vmem:[%s5 + $0x48] sm:$0xff]
  %v88 = vld [vmem:[%s5 + $0x50] sm:$0xff]
  %v89 = vld [vmem:[%s5 + $0x58] sm:$0xff]
  %v90 = vld [vmem:[%s5 + $0x60] sm:$0xff]
  %v91 = vld [vmem:[%s5 + $0x68] sm:$0xff]
  %v92 = vld [vmem:[%s5 + $0x70] sm:$0xff]
  %v93 = vld [vmem:[%s5 + $0x78] sm:$0xff]
  %v94 = vld [vmem:[%s5 + $0x80] sm:$0xff]
  %v95 = vld [vmem:[%s5 + $0x88] sm:$0xff]
  %v96 = vld [vmem:[%s5 + $0x90] sm:$0xff]
  %v97 = vld [vmem:[%s5 + $0x98] sm:$0xff]
  %v98 = vld [vmem:[%s5 + $0xa0] sm:$0xff]
  %v99 = vld [vmem:[%s5 + $0xa8] sm:$0xff]
  %v100 = vld [vmem:[%s5 + $0xb0] sm:$0xff]
  %v101 = vld [vmem:[%s5 + $0xb8] sm:$0xff]
  %v102 = vld [vmem:[%s5 + $0xc0] sm:$0xff]
  %v103 = vld [vmem:[%s5 + $0xc8] sm:$0xff]
  %v104 = vld [vmem:[%s5 + $0xd0] sm:$0xff]
  %v105 = vld [vmem:[%s5 + $0xd8] sm:$0xff]
  %v106 = vld [vmem:[%s5 + $0xe0] sm:$0xff]
  %v107 = vld [vmem:[%s5 + $0xe8] sm:$0xff]
  %v108 = vld [vmem:[%s5 + $0xf0] sm:$0xff]
  %v109 = vld [vmem:[%s5 + $0xf8] sm:$0xff]
  %v110 = vld [vmem:[%s5 + $0x100] sm:$0xff]
  %v111 = vld [vmem:[%s5 + $0x108] sm:$0xff]
  %v112 = vld [vmem:[%s5 + $0x110] sm:$0xff]
  %v113 = vld [vmem:[%s5 + $0x118] sm:$0xff]
  %v114 = vld [vmem:[%s5 + $0x120] sm:$0xff]
  %v115 = vld [vmem:[%s5 + $0x128] sm:$0xff]
  %v116 = vld [vmem:[%s5 + $0x130] sm:$0xff]
  %v117 = vld [vmem:[%s5 + $0x138] sm:$0xff]
  %v118 = vld [vmem:[%s5 + $0x140] sm:$0xff]
  %v119 = vld [vmem:[%s5 + $0x148] sm:$0xff]
  %v120 = vld [vmem:[%s5 + $0x150] sm:$0xff]
  %v121 = vld [vmem:[%s5 + $0x158] sm:$0xff]
  %v122 = vld [vmem:[%s5 + $0x160] sm:$0xff]
  %v123 = vld [vmem:[%s5 + $0x168] sm:$0xff]
  %v124 = vld [vmem:[%s5 + $0x170] sm:$0xff]
  %v125 = vld [vmem:[%s5 + $0x178] sm:$0xff]
  %v126 = vld [vmem:[%s5 + $0x180] sm:$0xff]
  %v127 = vld [vmem:[%s5 + $0x188] sm:$0xff]
  %v128 = vld [vmem:[%s5 + $0x190] sm:$0xff]
  %v129 = vld [vmem:[%s5 + $0x198] sm:$0xff]
  %v130 = vld [vmem:[%s5 + $0x1a0] sm:$0xff]
  %v131 = vld [vmem:[%s5 + $0x1a8] sm:$0xff]
  %v132 = vld [vmem:[%s5 + $0x1b0] sm:$0xff]
  %v133 = vld [vmem:[%s5 + $0x1b8] sm:$0xff]
  %v134 = vld [vmem:[%s5 + $0x1c0] sm:$0xff]
  %v135 = vld [vmem:[%s5 + $0x1c8] sm:$0xff]
  %v136 = vld [vmem:[%s5 + $0x1d0] sm:$0xff]
  %v137 = vld [vmem:[%s5 + $0x1d8] sm:$0xff]
  %v138 = vld [vmem:[%s5 + $0x1e0] sm:$0xff]
  %v139 = vld [vmem:[%s5 + $0x1e8] sm:$0xff]
  %v140 = vld [vmem:[%s5 + $0x1f0] sm:$0xff]
  %v141 = vld [vmem:[%s5 + $0x1f8] sm:$0xff]
  %142 = vmatprep.subr.mxu0 0.0
  %143 = vmatpush1.msra.mxu0 %v93
  %144 = vmatprep.subr.mxu0 0.0
  %145 = vmatpush1.msra.mxu0 %v92
  %146 = vmatprep.subr.mxu0 0.0
  %147 = vmatpush1.msra.mxu0 %v91
  %148 = vmatprep.subr.mxu0 0.0
  %149 = vmatpush1.msra.mxu0 %v90
  %150 = vmatprep.subr.mxu0 0.0
  %151 = vmatpush1.msra.mxu0 %v89
  %152 = vmatprep.subr.mxu0 0.0
  %153 = vmatpush1.msra.mxu0 %v88
  %154 = vmatprep.subr.mxu0 0.0
  %155 = vmatpush1.msra.mxu0 %v87
  %156 = vmatprep.subr.mxu0 0.0
  %157 = vmatpush1.msra.mxu0 %v86
  %158 = vmatprep.subr.mxu0 0.0
  %159 = vmatpush1.msra.mxu0 %v85
  %160 = vmatprep.subr.mxu0 0.0
  %161 = vmatpush1.msra.mxu0 %v84
  %162 = vmatprep.subr.mxu0 0.0
  %163 = vmatpush1.msra.mxu0 %v83
  %164 = vmatprep.subr.mxu0 0.0
  %165 = vmatpush1.msra.mxu0 %v82
  %166 = vmatprep.subr.mxu0 0.0
  %167 = vmatpush1.msra.mxu0 %v81
  %168 = vmatprep.subr.mxu0 0.0
  %169 = vmatpush1.msra.mxu0 %v80
  %170 = vmatprep.subr.mxu0 0.0
  %171 = vmatpush1.msra.mxu0 %v79
  %172 = vmatprep.subr.mxu0 0.0
  %173 = vmatpush1.msra.mxu0 %v78
  %174 = vmatprep.subr.mxu0 0.0
  %175 = vmatpush2.msra.mxu0 %v109
  %176 = vmatprep.subr.mxu0 0.0
  %177 = vmatpush2.msra.mxu0 %v108
  %178 = vmatprep.subr.mxu0 0.0
  %179 = vmatpush2.msra.mxu0 %v107
  %180 = vmatprep.subr.mxu0 0.0
  %181 = vmatpush2.msra.mxu0 %v106
  %182 = vmatprep.subr.mxu0 0.0
  %183 = vmatpush2.msra.mxu0 %v105
  %184 = vmatprep.subr.mxu0 0.0
  %185 = vmatpush2.msra.mxu0 %v104
  %186 = vmatprep.subr.mxu0 0.0
  %187 = vmatpush2.msra.mxu0 %v103
  %188 = vmatprep.subr.mxu0 0.0
  %189 = vmatpush2.msra.mxu0 %v102
  %190 = vmatprep.subr.mxu0 0.0
  %191 = vmatpush2.msra.mxu0 %v101
  %192 = vmatprep.subr.mxu0 0.0
  %193 = vmatpush2.msra.mxu0 %v100
  %194 = vmatprep.subr.mxu0 0.0
  %195 = vmatpush2.msra.mxu0 %v99
  %196 = vmatprep.subr.mxu0 0.0
  %197 = vmatpush2.msra.mxu0 %v98
  %198 = vmatprep.subr.mxu0 0.0
  %199 = vmatpush2.msra.mxu0 %v97
  %200 = vmatprep.subr.mxu0 0.0
  %201 = vmatpush2.msra.mxu0 %v96
  %202 = vmatprep.subr.mxu0 0.0
  %203 = vmatpush2.msra.mxu0 %v95
  %204 = vmatprep.subr.mxu0 0.0
  %205 = vmatpush2.msra.mxu0 %v94
  %206 = vmatprep.mubr.f32.mxu0 %v63
  %207 = vmatmul.mubr.f32.gmra.mxu0 %v62
  %v208 = vpop.f32.mrf.mxu0
  %v209 = vadd.f32 0.0, %v208
  %v210 = vpop.f32.mrf.mxu0
  %211 = vmatprep.mubr.f32.mxu0 %v67
  %212 = vmatmul.mubr.f32.gmra.mxu0 %v66
  %v213 = vpop.f32.mrf.mxu0
  %v214 = vadd.f32 0.0, %v213
  %v215 = vpop.f32.mrf.mxu0
  %216 = vmatprep.mubr.f32.mxu0 %v71
  %217 = vmatmul.mubr.f32.gmra.mxu0 %v70
  %v218 = vpop.f32.mrf.mxu0
  %v219 = vadd.f32 0.0, %v218
  %v220 = vpop.f32.mrf.mxu0
  %221 = vmatprep.mubr.f32.mxu0 %v75
  %222 = vmatmul.mubr.f32.gmra.mxu0 %v74
  %v223 = vpop.f32.mrf.mxu0
  %v224 = vadd.f32 0.0, %v223
  %v225 = vpop.f32.mrf.mxu0
  %226 = vdwg.mxu0
  %227 = vmatprep.subr.mxu0 0.0
  %228 = vmatpush1.msra.mxu0 %v125
  %229 = vmatprep.subr.mxu0 0.0
  %230 = vmatpush1.msra.mxu0 %v124
  %231 = vmatprep.subr.mxu0 0.0
  %232 = vmatpush1.msra.mxu0 %v123
  %233 = vmatprep.subr.mxu0 0.0
  %234 = vmatpush1.msra.mxu0 %v122
  %235 = vmatprep.subr.mxu0 0.0
  %236 = vmatpush1.msra.mxu0 %v121
  %237 = vmatprep.subr.mxu0 0.0
  %238 = vmatpush1.msra.mxu0 %v120
  %239 = vmatprep.subr.mxu0 0.0
  %240 = vmatpush1.msra.mxu0 %v119
  %241 = vmatprep.subr.mxu0 0.0
  %242 = vmatpush1.msra.mxu0 %v118
  %243 = vmatprep.subr.mxu0 0.0
  %244 = vmatpush1.msra.mxu0 %v117
  %245 = vmatprep.subr.mxu0 0.0
  %246 = vmatpush1.msra.mxu0 %v116
  %247 = vmatprep.subr.mxu0 0.0
  %248 = vmatpush1.msra.mxu0 %v115
  %249 = vmatprep.subr.mxu0 0.0
  %250 = vmatpush1.msra.mxu0 %v114
  %251 = vmatprep.subr.mxu0 0.0
  %252 = vmatpush1.msra.mxu0 %v113
  %253 = vmatprep.subr.mxu0 0.0
  %254 = vmatpush1.msra.mxu0 %v112
  %255 = vmatprep.subr.mxu0 0.0
  %256 = vmatpush1.msra.mxu0 %v111
  %257 = vmatprep.subr.mxu0 0.0
  %258 = vmatpush1.msra.mxu0 %v110
  %259 = vmatprep.subr.mxu0 0.0
  %260 = vmatpush2.msra.mxu0 %v141
  %261 = vmatprep.subr.mxu0 0.0
  %262 = vmatpush2.msra.mxu0 %v140
  %263 = vmatprep.subr.mxu0 0.0
  %264 = vmatpush2.msra.mxu0 %v139
  %265 = vmatprep.subr.mxu0 0.0
  %266 = vmatpush2.msra.mxu0 %v138
  %267 = vmatprep.subr.mxu0 0.0
  %268 = vmatpush2.msra.mxu0 %v137
  %269 = vmatprep.subr.mxu0 0.0
  %270 = vmatpush2.msra.mxu0 %v136
  %271 = vmatprep.subr.mxu0 0.0
  %272 = vmatpush2.msra.mxu0 %v135
  %273 = vmatprep.subr.mxu0 0.0
  %274 = vmatpush2.msra.mxu0 %v134
  %275 = vmatprep.subr.mxu0 0.0
  %276 = vmatpush2.msra.mxu0 %v133
  %277 = vmatprep.subr.mxu0 0.0
  %278 = vmatpush2.msra.mxu0 %v132
  %279 = vmatprep.subr.mxu0 0.0
  %280 = vmatpush2.msra.mxu0 %v131
  %281 = vmatprep.subr.mxu0 0.0
  %282 = vmatpush2.msra.mxu0 %v130
  %283 = vmatprep.subr.mxu0 0.0
  %284 = vmatpush2.msra.mxu0 %v129
  %285 = vmatprep.subr.mxu0 0.0
  %286 = vmatpush2.msra.mxu0 %v128
  %287 = vmatprep.subr.mxu0 0.0
  %288 = vmatpush2.msra.mxu0 %v127
  %289 = vmatprep.subr.mxu0 0.0
  %290 = vmatpush2.msra.mxu0 %v126
  %291 = vmatprep.mubr.f32.mxu0 %v65
  %292 = vmatmul.mubr.f32.gmra.mxu0 %v64
  %v293 = vpop.f32.mrf.mxu0
  %v294 = vadd.f32 %v209, %v293
  %v295 = vpop.f32.mrf.mxu0
  %296 = vmatprep.mubr.f32.mxu0 %v69
  %297 = vmatmul.mubr.f32.gmra.mxu0 %v68
  %v298 = vpop.f32.mrf.mxu0
  %v299 = vadd.f32 %v214, %v298
  %v300 = vpop.f32.mrf.mxu0
  %301 = vmatprep.mubr.f32.mxu0 %v73
  %302 = vmatmul.mubr.f32.gmra.mxu0 %v72
  %v303 = vpop.f32.mrf.mxu0
  %v304 = vadd.f32 %v219, %v303
  %v305 = vpop.f32.mrf.mxu0
  %306 = vmatprep.mubr.f32.mxu0 %v77
  %307 = vmatmul.mubr.f32.gmra.mxu0 %v76
  %v308 = vpop.f32.mrf.mxu0
  %v309 = vadd.f32 %v224, %v308
  %v310 = vpop.f32.mrf.mxu0
  %311 = vdwg.mxu0
  %v312 = vld [vmem:[%s1] sm:$0x3]
  %v313 = vld [vmem:[%s2] sm:$0x3]
  %315 = vset.pattern.permute.xlu0 0
  %316 = vperm.xlu0 %315, %v313
  %v317 = vpop.permute.xlu0 %316
  %vm319 = vcmask 261120
  %v321 = vsel %vm319, %v312, 0
  %323 = vmatprep.subr.mxu0 0.0
  %324 = vmatpush1.msra.mxu0 0.0
  %325 = vmatprep.subr.mxu0 0.0
  %326 = vmatpush1.msra.mxu0 0.0
  %327 = vmatprep.subr.mxu0 0.0
  %328 = vmatpush1.msra.mxu0 0.0
  %329 = vmatprep.subr.mxu0 0.0
  %330 = vmatpush1.msra.mxu0 0.0
  %331 = vmatprep.subr.mxu0 0.0
  %332 = vmatpush1.msra.mxu0 0.0
  %333 = vmatprep.subr.mxu0 0.0
  %334 = vmatpush1.msra.mxu0 0.0
  %335 = vmatprep.subr.mxu0 0.0
  %336 = vmatpush1.msra.mxu0 0.0
  %337 = vmatprep.subr.mxu0 0.0
  %338 = vmatpush1.msra.mxu0 0.0
  %339 = vmatprep.subr.mxu0 0.0
  %340 = vmatpush1.msra.mxu0 0.0
  %341 = vmatprep.subr.mxu0 0.0
  %342 = vmatpush1.msra.mxu0 0.0
  %343 = vmatprep.subr.mxu0 0.0
  %344 = vmatpush1.msra.mxu0 0.0
  %345 = vmatprep.subr.mxu0 0.0
  %346 = vmatpush1.msra.mxu0 0.0
  %347 = vmatprep.subr.mxu0 0.0
  %348 = vmatpush1.msra.mxu0 %v309
  %349 = vmatprep.subr.mxu0 0.0
  %350 = vmatpush1.msra.mxu0 %v304
  %351 = vmatprep.subr.mxu0 0.0
  %352 = vmatpush1.msra.mxu0 %v299
  %353 = vmatprep.subr.mxu0 0.0
  %354 = vmatpush1.msra.mxu0 %v294
  %355 = vmatprep.subr.mxu0 0.0
  %356 = vmatpush2.msra.mxu0 0.0
  %357 = vmatprep.subr.mxu0 0.0
  %358 = vmatpush2.msra.mxu0 0.0
  %359 = vmatprep.subr.mxu0 0.0
  %360 = vmatpush2.msra.mxu0 0.0
  %361 = vmatprep.subr.mxu0 0.0
  %362 = vmatpush2.msra.mxu0 0.0
  %363 = vmatprep.subr.mxu0 0.0
  %364 = vmatpush2.msra.mxu0 0.0
  %365 = vmatprep.subr.mxu0 0.0
  %366 = vmatpush2.msra.mxu0 0.0
  %367 = vmatprep.subr.mxu0 0.0
  %368 = vmatpush2.msra.mxu0 0.0
  %369 = vmatprep.subr.mxu0 0.0
  %370 = vmatpush2.msra.mxu0 0.0
  %371 = vmatprep.subr.mxu0 0.0
  %372 = vmatpush2.msra.mxu0 0.0
  %373 = vmatprep.subr.mxu0 0.0
  %374 = vmatpush2.msra.mxu0 0.0
  %375 = vmatprep.subr.mxu0 0.0
  %376 = vmatpush2.msra.mxu0 0.0
  %377 = vmatprep.subr.mxu0 0.0
  %378 = vmatpush2.msra.mxu0 0.0
  %379 = vmatprep.subr.mxu0 0.0
  %380 = vmatpush2.msra.mxu0 0.0
  %381 = vmatprep.subr.mxu0 0.0
  %382 = vmatpush2.msra.mxu0 0.0
  %383 = vmatprep.subr.mxu0 0.0
  %384 = vmatpush2.msra.mxu0 0.0
  %385 = vmatprep.subr.mxu0 0.0
  %386 = vmatpush2.msra.mxu0 0.0
  %387 = vmatprep.mubr.f32.mxu0 0.0
  %388 = vmatmul.mubr.f32.gmra.mxu0 %v321
  %v389 = vpop.f32.mrf.mxu0
  %v390 = vadd.f32 %v317, %v389
  %v391 = vpop.f32.mrf.mxu0
  %392 = vdwg.mxu0
  %v393 = vmax.f32 %v390, 0.0
  %v394 = vld [vmem:[%s3] sm:$0xff]
  %v395 = vld [vmem:[%s3 + $0x8] sm:$0xff]
  %v396 = vld [vmem:[%s3 + $0x10] sm:$0xff]
  %v397 = vld [vmem:[%s3 + $0x18] sm:$0xff]
  %v398 = vld [vmem:[%s4] sm:$0xff]
  %v399 = vld [vmem:[%s4 + $0x8] sm:$0xff]
  %v400 = vld [vmem:[%s4 + $0x10] sm:$0xff]
  %v401 = vld [vmem:[%s4 + $0x18] sm:$0xff]
  %403 = vset.pattern.permute.xlu0 0
  %404 = vperm.xlu0 %403, %v398
  %v405 = vpop.permute.xlu0 %404
  %408 = vset.pattern.permute.xlu0 0
  %409 = vperm.xlu0 %408, %v399
  %v410 = vpop.permute.xlu0 %409
  %413 = vset.pattern.permute.xlu0 0
  %414 = vperm.xlu0 %413, %v400
  %v415 = vpop.permute.xlu0 %414
  %418 = vset.pattern.permute.xlu0 0
  %419 = vperm.xlu0 %418, %v401
  %v420 = vpop.permute.xlu0 %419
  %vm422 = vcmask 15360
  %v424 = vsel %vm422, %v394, 0
  %v427 = vsel %vm422, %v395, 0
  %v430 = vsel %vm422, %v396, 0
  %v433 = vsel %vm422, %v397, 0
  %vm435 = vcmask 1041408
  %v437 = vsel %vm435, %v393, 0
  %439 = vmatprep.subr.mxu0 0.0
  %440 = vmatpush1.msra.mxu0 0.0
  %441 = vmatprep.subr.mxu0 0.0
  %442 = vmatpush1.msra.mxu0 0.0
  %443 = vmatprep.subr.mxu0 0.0
  %444 = vmatpush1.msra.mxu0 0.0
  %445 = vmatprep.subr.mxu0 0.0
  %446 = vmatpush1.msra.mxu0 0.0
  %447 = vmatprep.subr.mxu0 0.0
  %448 = vmatpush1.msra.mxu0 0.0
  %449 = vmatprep.subr.mxu0 0.0
  %450 = vmatpush1.msra.mxu0 0.0
  %451 = vmatprep.subr.mxu0 0.0
  %452 = vmatpush1.msra.mxu0 0.0
  %453 = vmatprep.subr.mxu0 0.0
  %454 = vmatpush1.msra.mxu0 0.0
  %455 = vmatprep.subr.mxu0 0.0
  %456 = vmatpush1.msra.mxu0 0.0
  %457 = vmatprep.subr.mxu0 0.0
  %458 = vmatpush1.msra.mxu0 0.0
  %459 = vmatprep.subr.mxu0 0.0
  %460 = vmatpush1.msra.mxu0 0.0
  %461 = vmatprep.subr.mxu0 0.0
  %462 = vmatpush1.msra.mxu0 0.0
  %463 = vmatprep.subr.mxu0 0.0
  %464 = vmatpush1.msra.mxu0 0.0
  %465 = vmatprep.subr.mxu0 0.0
  %466 = vmatpush1.msra.mxu0 0.0
  %467 = vmatprep.subr.mxu0 0.0
  %468 = vmatpush1.msra.mxu0 0.0
  %469 = vmatprep.subr.mxu0 0.0
  %470 = vmatpush1.msra.mxu0 %v437
  %471 = vmatprep.subr.mxu0 0.0
  %472 = vmatpush2.msra.mxu0 0.0
  %473 = vmatprep.subr.mxu0 0.0
  %474 = vmatpush2.msra.mxu0 0.0
  %475 = vmatprep.subr.mxu0 0.0
  %476 = vmatpush2.msra.mxu0 0.0
  %477 = vmatprep.subr.mxu0 0.0
  %478 = vmatpush2.msra.mxu0 0.0
  %479 = vmatprep.subr.mxu0 0.0
  %480 = vmatpush2.msra.mxu0 0.0
  %481 = vmatprep.subr.mxu0 0.0
  %482 = vmatpush2.msra.mxu0 0.0
  %483 = vmatprep.subr.mxu0 0.0
  %484 = vmatpush2.msra.mxu0 0.0
  %485 = vmatprep.subr.mxu0 0.0
  %486 = vmatpush2.msra.mxu0 0.0
  %487 = vmatprep.subr.mxu0 0.0
  %488 = vmatpush2.msra.mxu0 0.0
  %489 = vmatprep.subr.mxu0 0.0
  %490 = vmatpush2.msra.mxu0 0.0
  %491 = vmatprep.subr.mxu0 0.0
  %492 = vmatpush2.msra.mxu0 0.0
  %493 = vmatprep.subr.mxu0 0.0
  %494 = vmatpush2.msra.mxu0 0.0
  %495 = vmatprep.subr.mxu0 0.0
  %496 = vmatpush2.msra.mxu0 0.0
  %497 = vmatprep.subr.mxu0 0.0
  %498 = vmatpush2.msra.mxu0 0.0
  %499 = vmatprep.subr.mxu0 0.0
  %500 = vmatpush2.msra.mxu0 0.0
  %501 = vmatprep.subr.mxu0 0.0
  %502 = vmatpush2.msra.mxu0 0.0
  %503 = vmatprep.mubr.f32.mxu0 0.0
  %504 = vmatmul.mubr.f32.gmra.mxu0 %v424
  %v505 = vpop.f32.mrf.mxu0
  %v506 = vadd.f32 %v405, %v505
  %v507 = vpop.f32.mrf.mxu0
  %508 = vmatprep.mubr.f32.mxu0 0.0
  %509 = vmatmul.mubr.f32.gmra.mxu0 %v427
  %v510 = vpop.f32.mrf.mxu0
  %v511 = vadd.f32 %v410, %v510
  %v512 = vpop.f32.mrf.mxu0
  %513 = vmatprep.mubr.f32.mxu0 0.0
  %514 = vmatmul.mubr.f32.gmra.mxu0 %v430
  %v515 = vpop.f32.mrf.mxu0
  %v516 = vadd.f32 %v415, %v515
  %v517 = vpop.f32.mrf.mxu0
  %518 = vmatprep.mubr.f32.mxu0 0.0
  %519 = vmatmul.mubr.f32.gmra.mxu0 %v433
  %v520 = vpop.f32.mrf.mxu0
  %v521 = vadd.f32 %v420, %v520
  %v522 = vpop.f32.mrf.mxu0
  %523 = vdwg.mxu0
  %v524 = vld [vmem:[%s6] sm:$0xff]
  %v526 = vcombine.high %v524, %v524
  %v528 = vunpack.c.l.s4 1983009808
  %v529 = vunpack.c.0.s8 %v528
  %v530 = vlaneseq
  %v531 = vshrl.u32 %v530, 7
  %v532 = vsub.s32 %v529, %v531
  %v533 = vrot.slane %v524, %v532
  %v535 = vunpack.c.l.s4 1983009808
  %v536 = vunpack.c.0.s8 %v535
  %v537 = vlaneseq
  %v538 = vshrl.u32 %v537, 7
  %v539 = vsub.s32 %v536, %v538
  %v540 = vrot.slane %v526, %v539
  %v541 = vcombine.high %v533, %v533
  %v542 = vcombine.high %v540, %v540
  %v544 = vsel %vm422, %v506, 0
  %v547 = vsel %vm422, %v511, 0
  %v550 = vsel %vm422, %v516, 0
  %v553 = vsel %vm422, %v521, 0
  %v555 = vsel %vm435, %v533, 0
  %v557 = vsel %vm435, %v541, 0
  %v559 = vsel %vm435, %v540, 0
  %v561 = vsel %vm435, %v542, 0
  %563 = vmatprep.subr.mxu0 0.0
  %564 = vmatpush1.msra.mxu0 0.0
  %565 = vmatprep.subr.mxu0 0.0
  %566 = vmatpush1.msra.mxu0 0.0
  %567 = vmatprep.subr.mxu0 0.0
  %568 = vmatpush1.msra.mxu0 0.0
  %569 = vmatprep.subr.mxu0 0.0
  %570 = vmatpush1.msra.mxu0 0.0
  %571 = vmatprep.subr.mxu0 0.0
  %572 = vmatpush1.msra.mxu0 0.0
  %573 = vmatprep.subr.mxu0 0.0
  %574 = vmatpush1.msra.mxu0 0.0
  %575 = vmatprep.subr.mxu0 0.0
  %576 = vmatpush1.msra.mxu0 0.0
  %577 = vmatprep.subr.mxu0 0.0
  %578 = vmatpush1.msra.mxu0 0.0
  %579 = vmatprep.subr.mxu0 0.0
  %580 = vmatpush1.msra.mxu0 0.0
  %581 = vmatprep.subr.mxu0 0.0
  %582 = vmatpush1.msra.mxu0 0.0
  %583 = vmatprep.subr.mxu0 0.0
  %584 = vmatpush1.msra.mxu0 0.0
  %585 = vmatprep.subr.mxu0 0.0
  %586 = vmatpush1.msra.mxu0 0.0
  %587 = vmatprep.subr.mxu0 0.0
  %588 = vmatpush1.msra.mxu0 0.0
  %589 = vmatprep.subr.mxu0 0.0
  %590 = vmatpush1.msra.mxu0 0.0
  %591 = vmatprep.subr.mxu0 0.0
  %592 = vmatpush1.msra.mxu0 0.0
  %593 = vmatprep.subr.mxu0 %v557
  %594 = vmatpush1.msra.mxu0 %v555
  %595 = vmatprep.subr.mxu0 0.0
  %596 = vmatpush2.msra.mxu0 0.0
  %597 = vmatprep.subr.mxu0 0.0
  %598 = vmatpush2.msra.mxu0 0.0
  %599 = vmatprep.subr.mxu0 0.0
  %600 = vmatpush2.msra.mxu0 0.0
  %601 = vmatprep.subr.mxu0 0.0
  %602 = vmatpush2.msra.mxu0 0.0
  %603 = vmatprep.subr.mxu0 0.0
  %604 = vmatpush2.msra.mxu0 0.0
  %605 = vmatprep.subr.mxu0 0.0
  %606 = vmatpush2.msra.mxu0 0.0
  %607 = vmatprep.subr.mxu0 0.0
  %608 = vmatpush2.msra.mxu0 0.0
  %609 = vmatprep.subr.mxu0 0.0
  %610 = vmatpush2.msra.mxu0 0.0
  %611 = vmatprep.subr.mxu0 0.0
  %612 = vmatpush2.msra.mxu0 0.0
  %613 = vmatprep.subr.mxu0 0.0
  %614 = vmatpush2.msra.mxu0 0.0
  %615 = vmatprep.subr.mxu0 0.0
  %616 = vmatpush2.msra.mxu0 0.0
  %617 = vmatprep.subr.mxu0 0.0
  %618 = vmatpush2.msra.mxu0 0.0
  %619 = vmatprep.subr.mxu0 0.0
  %620 = vmatpush2.msra.mxu0 0.0
  %621 = vmatprep.subr.mxu0 0.0
  %622 = vmatpush2.msra.mxu0 0.0
  %623 = vmatprep.subr.mxu0 0.0
  %624 = vmatpush2.msra.mxu0 0.0
  %625 = vmatprep.subr.mxu0 0.0
  %626 = vmatpush2.msra.mxu0 0.0
  %627 = vmatprep.mubr.f32.mxu0 0.0
  %628 = vmatmul.mubr.f32.gmra.mxu0 %v544
  %v629 = vpop.f32.mrf.mxu0
  %v630 = vadd.f32 0.0, %v629
  %v631 = vpop.f32.mrf.mxu0
  %v632 = vadd.f32 0.0, %v631
  %633 = vmatprep.mubr.f32.mxu0 0.0
  %634 = vmatmul.mubr.f32.gmra.mxu0 %v547
  %v635 = vpop.f32.mrf.mxu0
  %v636 = vadd.f32 0.0, %v635
  %v637 = vpop.f32.mrf.mxu0
  %v638 = vadd.f32 0.0, %v637
  %639 = vmatprep.mubr.f32.mxu0 0.0
  %640 = vmatmul.mubr.f32.gmra.mxu0 %v550
  %v641 = vpop.f32.mrf.mxu0
  %v642 = vadd.f32 0.0, %v641
  %v643 = vpop.f32.mrf.mxu0
  %v644 = vadd.f32 0.0, %v643
  %645 = vmatprep.mubr.f32.mxu0 0.0
  %646 = vmatmul.mubr.f32.gmra.mxu0 %v553
  %v647 = vpop.f32.mrf.mxu0
  %v648 = vadd.f32 0.0, %v647
  %v649 = vpop.f32.mrf.mxu0
  %v650 = vadd.f32 0.0, %v649
  %651 = vdwg.mxu0
  %652 = vmatprep.subr.mxu0 0.0
  %653 = vmatpush1.msra.mxu0 0.0
  %654 = vmatprep.subr.mxu0 0.0
  %655 = vmatpush1.msra.mxu0 0.0
  %656 = vmatprep.subr.mxu0 0.0
  %657 = vmatpush1.msra.mxu0 0.0
  %658 = vmatprep.subr.mxu0 0.0
  %659 = vmatpush1.msra.mxu0 0.0
  %660 = vmatprep.subr.mxu0 0.0
  %661 = vmatpush1.msra.mxu0 0.0
  %662 = vmatprep.subr.mxu0 0.0
  %663 = vmatpush1.msra.mxu0 0.0
  %664 = vmatprep.subr.mxu0 0.0
  %665 = vmatpush1.msra.mxu0 0.0
  %666 = vmatprep.subr.mxu0 0.0
  %667 = vmatpush1.msra.mxu0 0.0
  %668 = vmatprep.subr.mxu0 0.0
  %669 = vmatpush1.msra.mxu0 0.0
  %670 = vmatprep.subr.mxu0 0.0
  %671 = vmatpush1.msra.mxu0 0.0
  %672 = vmatprep.subr.mxu0 0.0
  %673 = vmatpush1.msra.mxu0 0.0
  %674 = vmatprep.subr.mxu0 0.0
  %675 = vmatpush1.msra.mxu0 0.0
  %676 = vmatprep.subr.mxu0 0.0
  %677 = vmatpush1.msra.mxu0 0.0
  %678 = vmatprep.subr.mxu0 0.0
  %679 = vmatpush1.msra.mxu0 0.0
  %680 = vmatprep.subr.mxu0 0.0
  %681 = vmatpush1.msra.mxu0 0.0
  %682 = vmatprep.subr.mxu0 %v561
  %683 = vmatpush1.msra.mxu0 %v559
  %684 = vmatprep.subr.mxu0 0.0
  %685 = vmatpush2.msra.mxu0 0.0
  %686 = vmatprep.subr.mxu0 0.0
  %687 = vmatpush2.msra.mxu0 0.0
  %688 = vmatprep.subr.mxu0 0.0
  %689 = vmatpush2.msra.mxu0 0.0
  %690 = vmatprep.subr.mxu0 0.0
  %691 = vmatpush2.msra.mxu0 0.0
  %692 = vmatprep.subr.mxu0 0.0
  %693 = vmatpush2.msra.mxu0 0.0
  %694 = vmatprep.subr.mxu0 0.0
  %695 = vmatpush2.msra.mxu0 0.0
  %696 = vmatprep.subr.mxu0 0.0
  %697 = vmatpush2.msra.mxu0 0.0
  %698 = vmatprep.subr.mxu0 0.0
  %699 = vmatpush2.msra.mxu0 0.0
  %700 = vmatprep.subr.mxu0 0.0
  %701 = vmatpush2.msra.mxu0 0.0
  %702 = vmatprep.subr.mxu0 0.0
  %703 = vmatpush2.msra.mxu0 0.0
  %704 = vmatprep.subr.mxu0 0.0
  %705 = vmatpush2.msra.mxu0 0.0
  %706 = vmatprep.subr.mxu0 0.0
  %707 = vmatpush2.msra.mxu0 0.0
  %708 = vmatprep.subr.mxu0 0.0
  %709 = vmatpush2.msra.mxu0 0.0
  %710 = vmatprep.subr.mxu0 0.0
  %711 = vmatpush2.msra.mxu0 0.0
  %712 = vmatprep.subr.mxu0 0.0
  %713 = vmatpush2.msra.mxu0 0.0
  %714 = vmatprep.subr.mxu0 0.0
  %715 = vmatpush2.msra.mxu0 0.0
  %716 = vmatprep.mubr.f32.mxu0 0.0
  %717 = vmatmul.mubr.f32.gmra.mxu0 %v544
  %v718 = vpop.f32.mrf.mxu0
  %v719 = vadd.f32 0.0, %v718
  %v720 = vpop.f32.mrf.mxu0
  %v721 = vadd.f32 0.0, %v720
  %722 = vmatprep.mubr.f32.mxu0 0.0
  %723 = vmatmul.mubr.f32.gmra.mxu0 %v547
  %v724 = vpop.f32.mrf.mxu0
  %v725 = vadd.f32 0.0, %v724
  %v726 = vpop.f32.mrf.mxu0
  %v727 = vadd.f32 0.0, %v726
  %728 = vmatprep.mubr.f32.mxu0 0.0
  %729 = vmatmul.mubr.f32.gmra.mxu0 %v550
  %v730 = vpop.f32.mrf.mxu0
  %v731 = vadd.f32 0.0, %v730
  %v732 = vpop.f32.mrf.mxu0
  %v733 = vadd.f32 0.0, %v732
  %734 = vmatprep.mubr.f32.mxu0 0.0
  %735 = vmatmul.mubr.f32.gmra.mxu0 %v553
  %v736 = vpop.f32.mrf.mxu0
  %v737 = vadd.f32 0.0, %v736
  %v738 = vpop.f32.mrf.mxu0
  %v739 = vadd.f32 0.0, %v738
  %740 = vdwg.mxu0
  %v741 = vpack.c.bf16 %v66, %v62
  %v742 = vpack.c.bf16 %v67, %v63
  %v743 = vpack.c.bf16 %v68, %v64
  %v744 = vpack.c.bf16 %v69, %v65
  %v745 = vpack.c.bf16 %v74, %v70
  %v746 = vpack.c.bf16 %v75, %v71
  %v747 = vpack.c.bf16 %v76, %v72
  %v748 = vpack.c.bf16 %v77, %v73
  %v749 = vld [vmem:[%s7] sm:$0x1]
  %v750 = vld [vmem:[%s8] sm:$0x3]
  %752 = vset.pattern.permute.xlu0 0
  %753 = vperm.xlu0 %752, %v750
  %v754 = vpop.permute.xlu0 %753
  %v757 = vsel %vm319, %v749, 0
  %759 = vmatprep.subr.bf16.mxu0 0
  %760 = vmatpush1.bf16.msra.mxu0 0
  %761 = vmatprep.subr.bf16.mxu0 0
  %762 = vmatpush1.bf16.msra.mxu0 0
  %763 = vmatprep.subr.bf16.mxu0 0
  %764 = vmatpush1.bf16.msra.mxu0 0
  %765 = vmatprep.subr.bf16.mxu0 0
  %766 = vmatpush1.bf16.msra.mxu0 0
  %767 = vmatprep.subr.bf16.mxu0 0
  %768 = vmatpush1.bf16.msra.mxu0 0
  %769 = vmatprep.subr.bf16.mxu0 0
  %770 = vmatpush1.bf16.msra.mxu0 0
  %771 = vmatprep.subr.bf16.mxu0 %v746
  %772 = vmatpush1.bf16.msra.mxu0 %v745
  %773 = vmatprep.subr.bf16.mxu0 %v742
  %774 = vmatpush1.bf16.msra.mxu0 %v741
  %775 = vmatprep.subr.bf16.mxu0 0
  %776 = vmatpush2.bf16.msra.mxu0 0
  %777 = vmatprep.subr.bf16.mxu0 0
  %778 = vmatpush2.bf16.msra.mxu0 0
  %779 = vmatprep.subr.bf16.mxu0 0
  %780 = vmatpush2.bf16.msra.mxu0 0
  %781 = vmatprep.subr.bf16.mxu0 0
  %782 = vmatpush2.bf16.msra.mxu0 0
  %783 = vmatprep.subr.bf16.mxu0 0
  %784 = vmatpush2.bf16.msra.mxu0 0
  %785 = vmatprep.subr.bf16.mxu0 0
  %786 = vmatpush2.bf16.msra.mxu0 0
  %787 = vmatprep.subr.bf16.mxu0 0
  %788 = vmatpush2.bf16.msra.mxu0 0
  %789 = vmatprep.subr.bf16.mxu0 0
  %790 = vmatpush2.bf16.msra.mxu0 0
  %791 = vmatprep.mubr.bf16.mxu0 0
  %792 = vmatmul.mubr.bf16.gmra.mxu0 %v757
  %v793 = vpop.f32.mrf.mxu0
  %v794 = vadd.f32 %v754, %v793
  %v795 = vpop.f32.mrf.mxu0
  %v796 = vadd.f32 %v754, %v795
  %v797 = vpop.f32.mrf.mxu0
  %v798 = vpop.f32.mrf.mxu0
  %799 = vdwg.mxu0
  %800 = vmatprep.subr.bf16.mxu0 0
  %801 = vmatpush1.bf16.msra.mxu0 0
  %802 = vmatprep.subr.bf16.mxu0 0
  %803 = vmatpush1.bf16.msra.mxu0 0
  %804 = vmatprep.subr.bf16.mxu0 0
  %805 = vmatpush1.bf16.msra.mxu0 0
  %806 = vmatprep.subr.bf16.mxu0 0
  %807 = vmatpush1.bf16.msra.mxu0 0
  %808 = vmatprep.subr.bf16.mxu0 0
  %809 = vmatpush1.bf16.msra.mxu0 0
  %810 = vmatprep.subr.bf16.mxu0 0
  %811 = vmatpush1.bf16.msra.mxu0 0
  %812 = vmatprep.subr.bf16.mxu0 %v748
  %813 = vmatpush1.bf16.msra.mxu0 %v747
  %814 = vmatprep.subr.bf16.mxu0 %v744
  %815 = vmatpush1.bf16.msra.mxu0 %v743
  %816 = vmatprep.subr.bf16.mxu0 0
  %817 = vmatpush2.bf16.msra.mxu0 0
  %818 = vmatprep.subr.bf16.mxu0 0
  %819 = vmatpush2.bf16.msra.mxu0 0
  %820 = vmatprep.subr.bf16.mxu0 0
  %821 = vmatpush2.bf16.msra.mxu0 0
  %822 = vmatprep.subr.bf16.mxu0 0
  %823 = vmatpush2.bf16.msra.mxu0 0
  %824 = vmatprep.subr.bf16.mxu0 0
  %825 = vmatpush2.bf16.msra.mxu0 0
  %826 = vmatprep.subr.bf16.mxu0 0
  %827 = vmatpush2.bf16.msra.mxu0 0
  %828 = vmatprep.subr.bf16.mxu0 0
  %829 = vmatpush2.bf16.msra.mxu0 0
  %830 = vmatprep.subr.bf16.mxu0 0
  %831 = vmatpush2.bf16.msra.mxu0 0
  %832 = vmatprep.mubr.bf16.mxu0 0
  %833 = vmatmul.mubr.bf16.gmra.mxu0 %v757
  %v834 = vpop.f32.mrf.mxu0
  %v835 = vadd.f32 %v754, %v834
  %v836 = vpop.f32.mrf.mxu0
  %v837 = vadd.f32 %v754, %v836
  %v838 = vpop.f32.mrf.mxu0
  %v839 = vpop.f32.mrf.mxu0
  %840 = vdwg.mxu0
  %841 = vrot.lane.b32.xlu0 %v794, 34
  %v842 = vpop.permute.xlu0 %841
  %843 = vrot.lane.b32.xlu0 %v796, 34
  %v844 = vpop.permute.xlu0 %843
  %845 = vrot.lane.b32.xlu0 %v835, 34
  %v846 = vpop.permute.xlu0 %845
  %847 = vrot.lane.b32.xlu0 %v837, 34
  %v848 = vpop.permute.xlu0 %847
  %v849 = vlaneseq
  %v850 = vand.u32 %v849, 127
  %vm851 = vcmp.lt.s32.totalorder %v850, 34
  %v852 = vsel %vm851, %v846, %v848
  %v853 = vsel %vm851, %v844, %v846
  %v854 = vsel %vm851, %v842, %v844
  %v855 = vsel %vm851, %v848, %v842
  %v856 = vld [vmem:[%s17] ss:$8 sm:$0xf]
  %v858 = vlaneseq
  %v859 = vshrl.u32 %v858, 7
  %v860 = vsub.s32 0, %v859
  %v861 = vrot.slane %v856, %v860
  %v862 = vlaneseq
  %v863 = vshrl.u32 %v862, 7
  %v864 = vsub.s32 1, %v863
  %v865 = vrot.slane %v856, %v864
  %v866 = vlaneseq
  %v867 = vshrl.u32 %v866, 7
  %v868 = vsub.s32 2, %v867
  %v869 = vrot.slane %v856, %v868
  %v870 = vlaneseq
  %v871 = vshrl.u32 %v870, 7
  %v872 = vsub.s32 3, %v871
  %v873 = vrot.slane %v856, %v872
  %v878 = vmul.f32 %v855, %v861
  %v879 = vmul.f32 %v854, %v865
  %v880 = vmul.f32 %v853, %v869
  %v881 = vmul.f32 %v852, %v873
  %882 = vrot.lane.b32.xlu0 %v794, 32
  %v883 = vpop.permute.xlu0 %882
  %884 = vrot.lane.b32.xlu0 %v796, 32
  %v885 = vpop.permute.xlu0 %884
  %886 = vrot.lane.b32.xlu0 %v835, 32
  %v887 = vpop.permute.xlu0 %886
  %888 = vrot.lane.b32.xlu0 %v837, 32
  %v889 = vpop.permute.xlu0 %888
  %vm890 = vcmp.lt.s32.totalorder %v850, 32
  %v891 = vsel %vm890, %v887, %v889
  %v892 = vsel %vm890, %v885, %v887
  %v893 = vsel %vm890, %v883, %v885
  %v894 = vsel %vm890, %v889, %v883
  %s895 = scalar_lea.vmem %s17, 1
  %v896 = vld [vmem:[%s895] ss:$8 sm:$0xf]
  %v898 = vlaneseq
  %v899 = vshrl.u32 %v898, 7
  %v900 = vsub.s32 0, %v899
  %v901 = vrot.slane %v896, %v900
  %v902 = vlaneseq
  %v903 = vshrl.u32 %v902, 7
  %v904 = vsub.s32 1, %v903
  %v905 = vrot.slane %v896, %v904
  %v906 = vlaneseq
  %v907 = vshrl.u32 %v906, 7
  %v908 = vsub.s32 2, %v907
  %v909 = vrot.slane %v896, %v908
  %v910 = vlaneseq
  %v911 = vshrl.u32 %v910, 7
  %v912 = vsub.s32 3, %v911
  %v913 = vrot.slane %v896, %v912
  %v918 = vmul.f32 %v894, %v901
  %v919 = vmul.f32 %v893, %v905
  %v920 = vmul.f32 %v892, %v909
  %v921 = vmul.f32 %v891, %v913
  %922 = vrot.lane.b32.xlu0 %v794, 30
  %v923 = vpop.permute.xlu0 %922
  %924 = vrot.lane.b32.xlu0 %v796, 30
  %v925 = vpop.permute.xlu0 %924
  %926 = vrot.lane.b32.xlu0 %v835, 30
  %v927 = vpop.permute.xlu0 %926
  %928 = vrot.lane.b32.xlu0 %v837, 30
  %v929 = vpop.permute.xlu0 %928
  %vm930 = vcmp.lt.s32.totalorder %v850, 30
  %v931 = vsel %vm930, %v927, %v929
  %v932 = vsel %vm930, %v925, %v927
  %v933 = vsel %vm930, %v923, %v925
  %v934 = vsel %vm930, %v929, %v923
  %s935 = scalar_lea.vmem %s17, 2
  %v936 = vld [vmem:[%s935] ss:$8 sm:$0xf]
  %v938 = vlaneseq
  %v939 = vshrl.u32 %v938, 7
  %v940 = vsub.s32 0, %v939
  %v941 = vrot.slane %v936, %v940
  %v942 = vlaneseq
  %v943 = vshrl.u32 %v942, 7
  %v944 = vsub.s32 1, %v943
  %v945 = vrot.slane %v936, %v944
  %v946 = vlaneseq
  %v947 = vshrl.u32 %v946, 7
  %v948 = vsub.s32 2, %v947
  %v949 = vrot.slane %v936, %v948
  %v950 = vlaneseq
  %v951 = vshrl.u32 %v950, 7
  %v952 = vsub.s32 3, %v951
  %v953 = vrot.slane %v936, %v952
  %v958 = vmul.f32 %v934, %v941
  %v959 = vmul.f32 %v933, %v945
  %v960 = vmul.f32 %v932, %v949
  %v961 = vmul.f32 %v931, %v953
  %962 = vrot.lane.b32.xlu0 %v794, 2
  %v963 = vpop.permute.xlu0 %962
  %964 = vrot.lane.b32.xlu0 %v796, 2
  %v965 = vpop.permute.xlu0 %964
  %966 = vrot.lane.b32.xlu0 %v835, 2
  %v967 = vpop.permute.xlu0 %966
  %968 = vrot.lane.b32.xlu0 %v837, 2
  %v969 = vpop.permute.xlu0 %968
  %vm970 = vcmp.lt.s32.totalorder %v850, 2
  %v971 = vsel %vm970, %v967, %v969
  %v972 = vsel %vm970, %v965, %v967
  %v973 = vsel %vm970, %v963, %v965
  %v974 = vsel %vm970, %v969, %v963
  %s975 = scalar_lea.vmem %s17, 3
  %v976 = vld [vmem:[%s975] ss:$8 sm:$0xf]
  %v978 = vlaneseq
  %v979 = vshrl.u32 %v978, 7
  %v980 = vsub.s32 0, %v979
  %v981 = vrot.slane %v976, %v980
  %v982 = vlaneseq
  %v983 = vshrl.u32 %v982, 7
  %v984 = vsub.s32 1, %v983
  %v985 = vrot.slane %v976, %v984
  %v986 = vlaneseq
  %v987 = vshrl.u32 %v986, 7
  %v988 = vsub.s32 2, %v987
  %v989 = vrot.slane %v976, %v988
  %v990 = vlaneseq
  %v991 = vshrl.u32 %v990, 7
  %v992 = vsub.s32 3, %v991
  %v993 = vrot.slane %v976, %v992
  %v998 = vmul.f32 %v974, %v981
  %v999 = vmul.f32 %v973, %v985
  %v1000 = vmul.f32 %v972, %v989
  %v1001 = vmul.f32 %v971, %v993
  %1002 = vrot.lane.b32.xlu0 %v794, 126
  %v1003 = vpop.permute.xlu0 %1002
  %1004 = vrot.lane.b32.xlu0 %v796, 126
  %v1005 = vpop.permute.xlu0 %1004
  %1006 = vrot.lane.b32.xlu0 %v835, 126
  %v1007 = vpop.permute.xlu0 %1006
  %1008 = vrot.lane.b32.xlu0 %v837, 126
  %v1009 = vpop.permute.xlu0 %1008
  %vm1010 = vcmp.lt.s32.totalorder %v850, 126
  %v1011 = vsel %vm1010, %v1007, %v1009
  %v1012 = vsel %vm1010, %v1005, %v1007
  %v1013 = vsel %vm1010, %v1003, %v1005
  %v1014 = vsel %vm1010, %v1009, %v1003
  %s1015 = scalar_lea.vmem %s17, 5
  %v1016 = vld [vmem:[%s1015] ss:$8 sm:$0xf]
  %v1018 = vlaneseq
  %v1019 = vshrl.u32 %v1018, 7
  %v1020 = vsub.s32 0, %v1019
  %v1021 = vrot.slane %v1016, %v1020
  %v1022 = vlaneseq
  %v1023 = vshrl.u32 %v1022, 7
  %v1024 = vsub.s32 1, %v1023
  %v1025 = vrot.slane %v1016, %v1024
  %v1026 = vlaneseq
  %v1027 = vshrl.u32 %v1026, 7
  %v1028 = vsub.s32 2, %v1027
  %v1029 = vrot.slane %v1016, %v1028
  %v1030 = vlaneseq
  %v1031 = vshrl.u32 %v1030, 7
  %v1032 = vsub.s32 3, %v1031
  %v1033 = vrot.slane %v1016, %v1032
  %v1038 = vmul.f32 %v1013, %v1021
  %v1039 = vmul.f32 %v1012, %v1025
  %v1040 = vmul.f32 %v1011, %v1029
  %v1041 = vmul.f32 %v1014, %v1033
  %1042 = vrot.lane.b32.xlu0 %v794, 98
  %v1043 = vpop.permute.xlu0 %1042
  %1044 = vrot.lane.b32.xlu0 %v796, 98
  %v1045 = vpop.permute.xlu0 %1044
  %1046 = vrot.lane.b32.xlu0 %v835, 98
  %v1047 = vpop.permute.xlu0 %1046
  %1048 = vrot.lane.b32.xlu0 %v837, 98
  %v1049 = vpop.permute.xlu0 %1048
  %vm1050 = vcmp.lt.s32.totalorder %v850, 98
  %v1051 = vsel %vm1050, %v1047, %v1049
  %v1052 = vsel %vm1050, %v1045, %v1047
  %v1053 = vsel %vm1050, %v1043, %v1045
  %v1054 = vsel %vm1050, %v1049, %v1043
  %s1055 = scalar_lea.vmem %s17, 6
  %v1056 = vld [vmem:[%s1055] ss:$8 sm:$0xf]
  %v1058 = vlaneseq
  %v1059 = vshrl.u32 %v1058, 7
  %v1060 = vsub.s32 0, %v1059
  %v1061 = vrot.slane %v1056, %v1060
  %v1062 = vlaneseq
  %v1063 = vshrl.u32 %v1062, 7
  %v1064 = vsub.s32 1, %v1063
  %v1065 = vrot.slane %v1056, %v1064
  %v1066 = vlaneseq
  %v1067 = vshrl.u32 %v1066, 7
  %v1068 = vsub.s32 2, %v1067
  %v1069 = vrot.slane %v1056, %v1068
  %v1070 = vlaneseq
  %v1071 = vshrl.u32 %v1070, 7
  %v1072 = vsub.s32 3, %v1071
  %v1073 = vrot.slane %v1056, %v1072
  %v1078 = vmul.f32 %v1053, %v1061
  %v1079 = vmul.f32 %v1052, %v1065
  %v1080 = vmul.f32 %v1051, %v1069
  %v1081 = vmul.f32 %v1054, %v1073
  %1082 = vrot.lane.b32.xlu0 %v794, 96
  %v1083 = vpop.permute.xlu0 %1082
  %1084 = vrot.lane.b32.xlu0 %v796, 96
  %v1085 = vpop.permute.xlu0 %1084
  %1086 = vrot.lane.b32.xlu0 %v835, 96
  %v1087 = vpop.permute.xlu0 %1086
  %1088 = vrot.lane.b32.xlu0 %v837, 96
  %v1089 = vpop.permute.xlu0 %1088
  %vm1090 = vcmp.lt.s32.totalorder %v850, 96
  %v1091 = vsel %vm1090, %v1087, %v1089
  %v1092 = vsel %vm1090, %v1085, %v1087
  %v1093 = vsel %vm1090, %v1083, %v1085
  %v1094 = vsel %vm1090, %v1089, %v1083
  %s1095 = scalar_lea.vmem %s17, 7
  %v1096 = vld [vmem:[%s1095] ss:$8 sm:$0xf]
  %v1098 = vlaneseq
  %v1099 = vshrl.u32 %v1098, 7
  %v1100 = vsub.s32 0, %v1099
  %v1101 = vrot.slane %v1096, %v1100
  %v1102 = vlaneseq
  %v1103 = vshrl.u32 %v1102, 7
  %v1104 = vsub.s32 1, %v1103
  %v1105 = vrot.slane %v1096, %v1104
  %v1106 = vlaneseq
  %v1107 = vshrl.u32 %v1106, 7
  %v1108 = vsub.s32 2, %v1107
  %v1109 = vrot.slane %v1096, %v1108
  %v1110 = vlaneseq
  %v1111 = vshrl.u32 %v1110, 7
  %v1112 = vsub.s32 3, %v1111
  %v1113 = vrot.slane %v1096, %v1112
  %v1118 = vmul.f32 %v1093, %v1101
  %v1119 = vmul.f32 %v1092, %v1105
  %v1120 = vmul.f32 %v1091, %v1109
  %v1121 = vmul.f32 %v1094, %v1113
  %1122 = vrot.lane.b32.xlu0 %v794, 94
  %v1123 = vpop.permute.xlu0 %1122
  %1124 = vrot.lane.b32.xlu0 %v796, 94
  %v1125 = vpop.permute.xlu0 %1124
  %1126 = vrot.lane.b32.xlu0 %v835, 94
  %v1127 = vpop.permute.xlu0 %1126
  %1128 = vrot.lane.b32.xlu0 %v837, 94
  %v1129 = vpop.permute.xlu0 %1128
  %vm1130 = vcmp.lt.s32.totalorder %v850, 94
  %v1131 = vsel %vm1130, %v1127, %v1129
  %v1132 = vsel %vm1130, %v1125, %v1127
  %v1133 = vsel %vm1130, %v1123, %v1125
  %v1134 = vsel %vm1130, %v1129, %v1123
  %s1135 = scalar_lea.vmem %s17, 32
  %v1136 = vld [vmem:[%s1135] ss:$8 sm:$0xf]
  %v1138 = vlaneseq
  %v1139 = vshrl.u32 %v1138, 7
  %v1140 = vsub.s32 0, %v1139
  %v1141 = vrot.slane %v1136, %v1140
  %v1142 = vlaneseq
  %v1143 = vshrl.u32 %v1142, 7
  %v1144 = vsub.s32 1, %v1143
  %v1145 = vrot.slane %v1136, %v1144
  %v1146 = vlaneseq
  %v1147 = vshrl.u32 %v1146, 7
  %v1148 = vsub.s32 2, %v1147
  %v1149 = vrot.slane %v1136, %v1148
  %v1150 = vlaneseq
  %v1151 = vshrl.u32 %v1150, 7
  %v1152 = vsub.s32 3, %v1151
  %v1153 = vrot.slane %v1136, %v1152
  %v1158 = vmul.f32 %v1133, %v1141
  %v1159 = vmul.f32 %v1132, %v1145
  %v1160 = vmul.f32 %v1131, %v1149
  %v1161 = vmul.f32 %v1134, %v1153
  %v1166 = vrot.slane %v918, 6
  %v1167 = vrot.slane %v919, 6
  %v1168 = vrot.slane %v920, 6
  %v1169 = vrot.slane %v921, 6
  %v1178 = vrot.slane %v958, 4
  %v1179 = vrot.slane %v959, 4
  %v1180 = vrot.slane %v960, 4
  %v1181 = vrot.slane %v961, 4
  %v1190 = vrot.slane %v998, 2
  %v1191 = vrot.slane %v999, 2
  %v1192 = vrot.slane %v1000, 2
  %v1193 = vrot.slane %v1001, 2
  %v1202 = vrot.slane %v1038, 6
  %v1203 = vrot.slane %v1039, 6
  %v1204 = vrot.slane %v1040, 6
  %v1205 = vrot.slane %v1041, 6
  %v1214 = vrot.slane %v1078, 4
  %v1215 = vrot.slane %v1079, 4
  %v1216 = vrot.slane %v1080, 4
  %v1217 = vrot.slane %v1081, 4
  %v1226 = vrot.slane %v1118, 2
  %v1227 = vrot.slane %v1119, 2
  %v1228 = vrot.slane %v1120, 2
  %v1229 = vrot.slane %v1121, 2
  %v1234 = vsel %vm435, %v878, %v1166
  %v1235 = vsel %vm435, %v879, %v1167
  %v1236 = vsel %vm435, %v880, %v1168
  %v1237 = vsel %vm435, %v881, %v1169
  %vm1238 = vcmask 1043456
  %v1239 = vsel %vm1238, %v1234, %v1178
  %v1240 = vsel %vm1238, %v1235, %v1179
  %v1241 = vsel %vm1238, %v1236, %v1180
  %v1242 = vsel %vm1238, %v1237, %v1181
  %vm1243 = vcmask 1045504
  %v1244 = vsel %vm1243, %v1239, %v1190
  %v1245 = vsel %vm1243, %v1240, %v1191
  %v1246 = vsel %vm1243, %v1241, %v1192
  %v1247 = vsel %vm1243, %v1242, %v1193
  %v1248 = vsel %vm435, %v794, %v1202
  %v1249 = vsel %vm435, %v796, %v1203
  %v1250 = vsel %vm435, %v835, %v1204
  %v1251 = vsel %vm435, %v837, %v1205
  %v1252 = vsel %vm1238, %v1248, %v1214
  %v1253 = vsel %vm1238, %v1249, %v1215
  %v1254 = vsel %vm1238, %v1250, %v1216
  %v1255 = vsel %vm1238, %v1251, %v1217
  %v1256 = vsel %vm1243, %v1252, %v1226
  %v1257 = vsel %vm1243, %v1253, %v1227
  %v1258 = vsel %vm1243, %v1254, %v1228
  %v1259 = vsel %vm1243, %v1255, %v1229
  %v1260 = vpack.c.bf16 %v1256, %v1244
  %v1261 = vpack.c.bf16 %v1257, %v1245
  %v1262 = vpack.c.bf16 %v1258, %v1246
  %v1263 = vpack.c.bf16 %v1259, %v1247
  %v1264 = vpack.c.bf16 %v1158, %v1158
  %v1265 = vpack.c.bf16 %v1159, %v1159
  %v1266 = vpack.c.bf16 %v1160, %v1160
  %v1267 = vpack.c.bf16 %v1161, %v1161
  %v1268 = vld [vmem:[%s9] sm:$0x1]
  %v1269 = vld [vmem:[%s10] sm:$0x3]
  %1271 = vset.pattern.permute.xlu0 0
  %1272 = vperm.xlu0 %1271, %v1269
  %v1273 = vpop.permute.xlu0 %1272
  %vm1275 = vcmask 146432
  %v1277 = vsel %vm1275, %v1268, 0
  %vm1279 = vcmask 1040384
  %v1281 = vsel %vm1279, %v1264, 0
  %v1284 = vsel %vm1279, %v1265, 0
  %v1287 = vsel %vm1279, %v1266, 0
  %v1290 = vsel %vm1279, %v1267, 0
  %1292 = vmatprep.subr.bf16.mxu0 0
  %1293 = vmatpush1.bf16.msra.mxu0 0
  %1294 = vmatprep.subr.bf16.mxu0 0
  %1295 = vmatpush1.bf16.msra.mxu0 0
  %1296 = vmatprep.subr.bf16.mxu0 0
  %1297 = vmatpush1.bf16.msra.mxu0 0
  %1298 = vmatprep.subr.bf16.mxu0 0
  %1299 = vmatpush1.bf16.msra.mxu0 0
  %1300 = vmatprep.subr.bf16.mxu0 0
  %1301 = vmatpush1.bf16.msra.mxu0 0
  %1302 = vmatprep.subr.bf16.mxu0 0
  %1303 = vmatpush1.bf16.msra.mxu0 0
  %1304 = vmatprep.subr.bf16.mxu0 %v1284
  %1305 = vmatpush1.bf16.msra.mxu0 %v1281
  %1306 = vmatprep.subr.bf16.mxu0 %v1261
  %1307 = vmatpush1.bf16.msra.mxu0 %v1260
  %1308 = vmatprep.subr.bf16.mxu0 0
  %1309 = vmatpush2.bf16.msra.mxu0 0
  %1310 = vmatprep.subr.bf16.mxu0 0
  %1311 = vmatpush2.bf16.msra.mxu0 0
  %1312 = vmatprep.subr.bf16.mxu0 0
  %1313 = vmatpush2.bf16.msra.mxu0 0
  %1314 = vmatprep.subr.bf16.mxu0 0
  %1315 = vmatpush2.bf16.msra.mxu0 0
  %1316 = vmatprep.subr.bf16.mxu0 0
  %1317 = vmatpush2.bf16.msra.mxu0 0
  %1318 = vmatprep.subr.bf16.mxu0 0
  %1319 = vmatpush2.bf16.msra.mxu0 0
  %1320 = vmatprep.subr.bf16.mxu0 0
  %1321 = vmatpush2.bf16.msra.mxu0 0
  %1322 = vmatprep.subr.bf16.mxu0 0
  %1323 = vmatpush2.bf16.msra.mxu0 0
  %1324 = vmatprep.mubr.bf16.mxu0 0
  %1325 = vmatmul.mubr.bf16.gmra.mxu0 %v1277
  %v1326 = vpop.f32.mrf.mxu0
  %v1327 = vadd.f32 %v1273, %v1326
  %v1328 = vpop.f32.mrf.mxu0
  %v1329 = vadd.f32 %v1273, %v1328
  %v1330 = vpop.f32.mrf.mxu0
  %v1331 = vpop.f32.mrf.mxu0
  %1332 = vdwg.mxu0
  %1333 = vmatprep.subr.bf16.mxu0 0
  %1334 = vmatpush1.bf16.msra.mxu0 0
  %1335 = vmatprep.subr.bf16.mxu0 0
  %1336 = vmatpush1.bf16.msra.mxu0 0
  %1337 = vmatprep.subr.bf16.mxu0 0
  %1338 = vmatpush1.bf16.msra.mxu0 0
  %1339 = vmatprep.subr.bf16.mxu0 0
  %1340 = vmatpush1.bf16.msra.mxu0 0
  %1341 = vmatprep.subr.bf16.mxu0 0
  %1342 = vmatpush1.bf16.msra.mxu0 0
  %1343 = vmatprep.subr.bf16.mxu0 0
  %1344 = vmatpush1.bf16.msra.mxu0 0
  %1345 = vmatprep.subr.bf16.mxu0 %v1290
  %1346 = vmatpush1.bf16.msra.mxu0 %v1287
  %1347 = vmatprep.subr.bf16.mxu0 %v1263
  %1348 = vmatpush1.bf16.msra.mxu0 %v1262
  %1349 = vmatprep.subr.bf16.mxu0 0
  %1350 = vmatpush2.bf16.msra.mxu0 0
  %1351 = vmatprep.subr.bf16.mxu0 0
  %1352 = vmatpush2.bf16.msra.mxu0 0
  %1353 = vmatprep.subr.bf16.mxu0 0
  %1354 = vmatpush2.bf16.msra.mxu0 0
  %1355 = vmatprep.subr.bf16.mxu0 0
  %1356 = vmatpush2.bf16.msra.mxu0 0
  %1357 = vmatprep.subr.bf16.mxu0 0
  %1358 = vmatpush2.bf16.msra.mxu0 0
  %1359 = vmatprep.subr.bf16.mxu0 0
  %1360 = vmatpush2.bf16.msra.mxu0 0
  %1361 = vmatprep.subr.bf16.mxu0 0
  %1362 = vmatpush2.bf16.msra.mxu0 0
  %1363 = vmatprep.subr.bf16.mxu0 0
  %1364 = vmatpush2.bf16.msra.mxu0 0
  %1365 = vmatprep.mubr.bf16.mxu0 0
  %1366 = vmatmul.mubr.bf16.gmra.mxu0 %v1277
  %v1367 = vpop.f32.mrf.mxu0
  %v1368 = vadd.f32 %v1273, %v1367
  %v1369 = vpop.f32.mrf.mxu0
  %v1370 = vadd.f32 %v1273, %v1369
  %v1371 = vpop.f32.mrf.mxu0
  %v1372 = vpop.f32.mrf.mxu0
  %1373 = vdwg.mxu0
  %v1374 = vmax.f32 %v1327, 0.0
  %v1375 = vmax.f32 %v1329, 0.0
  %v1376 = vmax.f32 %v1368, 0.0
  %v1377 = vmax.f32 %v1370, 0.0
  %v1378 = vld [vmem:[%s11] sm:$0x3]
  %1380 = vset.pattern.permute.xlu0 0
  %1381 = vperm.xlu0 %1380, %v1378
  %v1382 = vpop.permute.xlu0 %1381
  %v1384 = vmul.f32 %v1374, %v1382
  %v1385 = vmul.f32 %v1375, %v1382
  %v1386 = vmul.f32 %v1376, %v1382
  %v1387 = vmul.f32 %v1377, %v1382
  %v1388 = vld [vmem:[%s12] sm:$0x3]
  %1390 = vset.pattern.permute.xlu0 0
  %1391 = vperm.xlu0 %1390, %v1388
  %v1392 = vpop.permute.xlu0 %1391
  %v1394 = vadd.f32 %v1384, %v1392
  %v1395 = vadd.f32 %v1385, %v1392
  %v1396 = vadd.f32 %v1386, %v1392
  %v1397 = vadd.f32 %v1387, %v1392
  %1398 = vrot.lane.b32.xlu0 %v1394, 34
  %v1399 = vpop.permute.xlu0 %1398
  %1400 = vrot.lane.b32.xlu0 %v1395, 34
  %v1401 = vpop.permute.xlu0 %1400
  %1402 = vrot.lane.b32.xlu0 %v1396, 34
  %v1403 = vpop.permute.xlu0 %1402
  %1404 = vrot.lane.b32.xlu0 %v1397, 34
  %v1405 = vpop.permute.xlu0 %1404
  %v1406 = vsel %vm851, %v1403, %v1405
  %v1407 = vsel %vm851, %v1401, %v1403
  %v1408 = vsel %vm851, %v1399, %v1401
  %v1409 = vsel %vm851, %v1405, %v1399
  %v1410 = vmul.f32 %v1409, %v861
  %v1411 = vmul.f32 %v1408, %v865
  %v1412 = vmul.f32 %v1407, %v869
  %v1413 = vmul.f32 %v1406, %v873
  %1414 = vrot.lane.b32.xlu0 %v1394, 32
  %v1415 = vpop.permute.xlu0 %1414
  %1416 = vrot.lane.b32.xlu0 %v1395, 32
  %v1417 = vpop.permute.xlu0 %1416
  %1418 = vrot.lane.b32.xlu0 %v1396, 32
  %v1419 = vpop.permute.xlu0 %1418
  %1420 = vrot.lane.b32.xlu0 %v1397, 32
  %v1421 = vpop.permute.xlu0 %1420
  %v1422 = vsel %vm890, %v1419, %v1421
  %v1423 = vsel %vm890, %v1417, %v1419
  %v1424 = vsel %vm890, %v1415, %v1417
  %v1425 = vsel %vm890, %v1421, %v1415
  %v1426 = vmul.f32 %v1425, %v901
  %v1427 = vmul.f32 %v1424, %v905
  %v1428 = vmul.f32 %v1423, %v909
  %v1429 = vmul.f32 %v1422, %v913
  %1430 = vrot.lane.b32.xlu0 %v1394, 30
  %v1431 = vpop.permute.xlu0 %1430
  %1432 = vrot.lane.b32.xlu0 %v1395, 30
  %v1433 = vpop.permute.xlu0 %1432
  %1434 = vrot.lane.b32.xlu0 %v1396, 30
  %v1435 = vpop.permute.xlu0 %1434
  %1436 = vrot.lane.b32.xlu0 %v1397, 30
  %v1437 = vpop.permute.xlu0 %1436
  %v1438 = vsel %vm930, %v1435, %v1437
  %v1439 = vsel %vm930, %v1433, %v1435
  %v1440 = vsel %vm930, %v1431, %v1433
  %v1441 = vsel %vm930, %v1437, %v1431
  %v1442 = vmul.f32 %v1441, %v941
  %v1443 = vmul.f32 %v1440, %v945
  %v1444 = vmul.f32 %v1439, %v949
  %v1445 = vmul.f32 %v1438, %v953
  %1446 = vrot.lane.b32.xlu0 %v1394, 2
  %v1447 = vpop.permute.xlu0 %1446
  %1448 = vrot.lane.b32.xlu0 %v1395, 2
  %v1449 = vpop.permute.xlu0 %1448
  %1450 = vrot.lane.b32.xlu0 %v1396, 2
  %v1451 = vpop.permute.xlu0 %1450
  %1452 = vrot.lane.b32.xlu0 %v1397, 2
  %v1453 = vpop.permute.xlu0 %1452
  %v1454 = vsel %vm970, %v1451, %v1453
  %v1455 = vsel %vm970, %v1449, %v1451
  %v1456 = vsel %vm970, %v1447, %v1449
  %v1457 = vsel %vm970, %v1453, %v1447
  %v1458 = vmul.f32 %v1457, %v981
  %v1459 = vmul.f32 %v1456, %v985
  %v1460 = vmul.f32 %v1455, %v989
  %v1461 = vmul.f32 %v1454, %v993
  %1462 = vrot.lane.b32.xlu0 %v1394, 126
  %v1463 = vpop.permute.xlu0 %1462
  %1464 = vrot.lane.b32.xlu0 %v1395, 126
  %v1465 = vpop.permute.xlu0 %1464
  %1466 = vrot.lane.b32.xlu0 %v1396, 126
  %v1467 = vpop.permute.xlu0 %1466
  %1468 = vrot.lane.b32.xlu0 %v1397, 126
  %v1469 = vpop.permute.xlu0 %1468
  %v1470 = vsel %vm1010, %v1467, %v1469
  %v1471 = vsel %vm1010, %v1465, %v1467
  %v1472 = vsel %vm1010, %v1463, %v1465
  %v1473 = vsel %vm1010, %v1469, %v1463
  %v1474 = vmul.f32 %v1472, %v1021
  %v1475 = vmul.f32 %v1471, %v1025
  %v1476 = vmul.f32 %v1470, %v1029
  %v1477 = vmul.f32 %v1473, %v1033
  %1478 = vrot.lane.b32.xlu0 %v1394, 98
  %v1479 = vpop.permute.xlu0 %1478
  %1480 = vrot.lane.b32.xlu0 %v1395, 98
  %v1481 = vpop.permute.xlu0 %1480
  %1482 = vrot.lane.b32.xlu0 %v1396, 98
  %v1483 = vpop.permute.xlu0 %1482
  %1484 = vrot.lane.b32.xlu0 %v1397, 98
  %v1485 = vpop.permute.xlu0 %1484
  %v1486 = vsel %vm1050, %v1483, %v1485
  %v1487 = vsel %vm1050, %v1481, %v1483
  %v1488 = vsel %vm1050, %v1479, %v1481
  %v1489 = vsel %vm1050, %v1485, %v1479
  %v1490 = vmul.f32 %v1488, %v1061
  %v1491 = vmul.f32 %v1487, %v1065
  %v1492 = vmul.f32 %v1486, %v1069
  %v1493 = vmul.f32 %v1489, %v1073
  %1494 = vrot.lane.b32.xlu0 %v1394, 96
  %v1495 = vpop.permute.xlu0 %1494
  %1496 = vrot.lane.b32.xlu0 %v1395, 96
  %v1497 = vpop.permute.xlu0 %1496
  %1498 = vrot.lane.b32.xlu0 %v1396, 96
  %v1499 = vpop.permute.xlu0 %1498
  %1500 = vrot.lane.b32.xlu0 %v1397, 96
  %v1501 = vpop.permute.xlu0 %1500
  %v1502 = vsel %vm1090, %v1499, %v1501
  %v1503 = vsel %vm1090, %v1497, %v1499
  %v1504 = vsel %vm1090, %v1495, %v1497
  %v1505 = vsel %vm1090, %v1501, %v1495
  %v1506 = vmul.f32 %v1504, %v1101
  %v1507 = vmul.f32 %v1503, %v1105
  %v1508 = vmul.f32 %v1502, %v1109
  %v1509 = vmul.f32 %v1505, %v1113
  %1510 = vrot.lane.b32.xlu0 %v1394, 94
  %v1511 = vpop.permute.xlu0 %1510
  %1512 = vrot.lane.b32.xlu0 %v1395, 94
  %v1513 = vpop.permute.xlu0 %1512
  %1514 = vrot.lane.b32.xlu0 %v1396, 94
  %v1515 = vpop.permute.xlu0 %1514
  %1516 = vrot.lane.b32.xlu0 %v1397, 94
  %v1517 = vpop.permute.xlu0 %1516
  %v1518 = vsel %vm1130, %v1515, %v1517
  %v1519 = vsel %vm1130, %v1513, %v1515
  %v1520 = vsel %vm1130, %v1511, %v1513
  %v1521 = vsel %vm1130, %v1517, %v1511
  %v1522 = vmul.f32 %v1520, %v1141
  %v1523 = vmul.f32 %v1519, %v1145
  %v1524 = vmul.f32 %v1518, %v1149
  %v1525 = vmul.f32 %v1521, %v1153
  %v1530 = vrot.slane %v1426, 6
  %v1531 = vrot.slane %v1427, 6
  %v1532 = vrot.slane %v1428, 6
  %v1533 = vrot.slane %v1429, 6
  %v1542 = vrot.slane %v1442, 4
  %v1543 = vrot.slane %v1443, 4
  %v1544 = vrot.slane %v1444, 4
  %v1545 = vrot.slane %v1445, 4
  %v1554 = vrot.slane %v1458, 2
  %v1555 = vrot.slane %v1459, 2
  %v1556 = vrot.slane %v1460, 2
  %v1557 = vrot.slane %v1461, 2
  %v1566 = vrot.slane %v1474, 6
  %v1567 = vrot.slane %v1475, 6
  %v1568 = vrot.slane %v1476, 6
  %v1569 = vrot.slane %v1477, 6
  %v1578 = vrot.slane %v1490, 4
  %v1579 = vrot.slane %v1491, 4
  %v1580 = vrot.slane %v1492, 4
  %v1581 = vrot.slane %v1493, 4
  %v1590 = vrot.slane %v1506, 2
  %v1591 = vrot.slane %v1507, 2
  %v1592 = vrot.slane %v1508, 2
  %v1593 = vrot.slane %v1509, 2
  %v1598 = vsel %vm435, %v1410, %v1530
  %v1599 = vsel %vm435, %v1411, %v1531
  %v1600 = vsel %vm435, %v1412, %v1532
  %v1601 = vsel %vm435, %v1413, %v1533
  %v1602 = vsel %vm1238, %v1598, %v1542
  %v1603 = vsel %vm1238, %v1599, %v1543
  %v1604 = vsel %vm1238, %v1600, %v1544
  %v1605 = vsel %vm1238, %v1601, %v1545
  %v1606 = vsel %vm1243, %v1602, %v1554
  %v1607 = vsel %vm1243, %v1603, %v1555
  %v1608 = vsel %vm1243, %v1604, %v1556
  %v1609 = vsel %vm1243, %v1605, %v1557
  %v1610 = vsel %vm435, %v1394, %v1566
  %v1611 = vsel %vm435, %v1395, %v1567
  %v1612 = vsel %vm435, %v1396, %v1568
  %v1613 = vsel %vm435, %v1397, %v1569
  %v1614 = vsel %vm1238, %v1610, %v1578
  %v1615 = vsel %vm1238, %v1611, %v1579
  %v1616 = vsel %vm1238, %v1612, %v1580
  %v1617 = vsel %vm1238, %v1613, %v1581
  %v1618 = vsel %vm1243, %v1614, %v1590
  %v1619 = vsel %vm1243, %v1615, %v1591
  %v1620 = vsel %vm1243, %v1616, %v1592
  %v1621 = vsel %vm1243, %v1617, %v1593
  %v1622 = vpack.c.bf16 %v1618, %v1606
  %v1623 = vpack.c.bf16 %v1619, %v1607
  %v1624 = vpack.c.bf16 %v1620, %v1608
  %v1625 = vpack.c.bf16 %v1621, %v1609
  %v1626 = vpack.c.bf16 %v1522, %v1522
  %v1627 = vpack.c.bf16 %v1523, %v1523
  %v1628 = vpack.c.bf16 %v1524, %v1524
  %v1629 = vpack.c.bf16 %v1525, %v1525
  %v1630 = vld [vmem:[%s13] sm:$0x1]
  %v1631 = vld [vmem:[%s14] sm:$0x3]
  %1633 = vset.pattern.permute.xlu0 0
  %1634 = vperm.xlu0 %1633, %v1631
  %v1635 = vpop.permute.xlu0 %1634
  %v1638 = vsel %vm1275, %v1630, 0
  %v1641 = vsel %vm1279, %v1626, 0
  %v1644 = vsel %vm1279, %v1627, 0
  %v1647 = vsel %vm1279, %v1628, 0
  %v1650 = vsel %vm1279, %v1629, 0
  %1652 = vmatprep.subr.bf16.mxu0 0
  %1653 = vmatpush1.bf16.msra.mxu0 0
  %1654 = vmatprep.subr.bf16.mxu0 0
  %1655 = vmatpush1.bf16.msra.mxu0 0
  %1656 = vmatprep.subr.bf16.mxu0 0
  %1657 = vmatpush1.bf16.msra.mxu0 0
  %1658 = vmatprep.subr.bf16.mxu0 0
  %1659 = vmatpush1.bf16.msra.mxu0 0
  %1660 = vmatprep.subr.bf16.mxu0 0
  %1661 = vmatpush1.bf16.msra.mxu0 0
  %1662 = vmatprep.subr.bf16.mxu0 0
  %1663 = vmatpush1.bf16.msra.mxu0 0
  %1664 = vmatprep.subr.bf16.mxu0 %v1644
  %1665 = vmatpush1.bf16.msra.mxu0 %v1641
  %1666 = vmatprep.subr.bf16.mxu0 %v1623
  %1667 = vmatpush1.bf16.msra.mxu0 %v1622
  %1668 = vmatprep.subr.bf16.mxu0 0
  %1669 = vmatpush2.bf16.msra.mxu0 0
  %1670 = vmatprep.subr.bf16.mxu0 0
  %1671 = vmatpush2.bf16.msra.mxu0 0
  %1672 = vmatprep.subr.bf16.mxu0 0
  %1673 = vmatpush2.bf16.msra.mxu0 0
  %1674 = vmatprep.subr.bf16.mxu0 0
  %1675 = vmatpush2.bf16.msra.mxu0 0
  %1676 = vmatprep.subr.bf16.mxu0 0
  %1677 = vmatpush2.bf16.msra.mxu0 0
  %1678 = vmatprep.subr.bf16.mxu0 0
  %1679 = vmatpush2.bf16.msra.mxu0 0
  %1680 = vmatprep.subr.bf16.mxu0 0
  %1681 = vmatpush2.bf16.msra.mxu0 0
  %1682 = vmatprep.subr.bf16.mxu0 0
  %1683 = vmatpush2.bf16.msra.mxu0 0
  %1684 = vmatprep.mubr.bf16.mxu0 0
  %1685 = vmatmul.mubr.bf16.gmra.mxu0 %v1638
  %v1686 = vpop.f32.mrf.mxu0
  %v1687 = vadd.f32 %v1635, %v1686
  %v1688 = vpop.f32.mrf.mxu0
  %v1689 = vadd.f32 %v1635, %v1688
  %v1690 = vpop.f32.mrf.mxu0
  %v1691 = vpop.f32.mrf.mxu0
  %1692 = vdwg.mxu0
  %1693 = vmatprep.subr.bf16.mxu0 0
  %1694 = vmatpush1.bf16.msra.mxu0 0
  %1695 = vmatprep.subr.bf16.mxu0 0
  %1696 = vmatpush1.bf16.msra.mxu0 0
  %1697 = vmatprep.subr.bf16.mxu0 0
  %1698 = vmatpush1.bf16.msra.mxu0 0
  %1699 = vmatprep.subr.bf16.mxu0 0
  %1700 = vmatpush1.bf16.msra.mxu0 0
  %1701 = vmatprep.subr.bf16.mxu0 0
  %1702 = vmatpush1.bf16.msra.mxu0 0
  %1703 = vmatprep.subr.bf16.mxu0 0
  %1704 = vmatpush1.bf16.msra.mxu0 0
  %1705 = vmatprep.subr.bf16.mxu0 %v1650
  %1706 = vmatpush1.bf16.msra.mxu0 %v1647
  %1707 = vmatprep.subr.bf16.mxu0 %v1625
  %1708 = vmatpush1.bf16.msra.mxu0 %v1624
  %1709 = vmatprep.subr.bf16.mxu0 0
  %1710 = vmatpush2.bf16.msra.mxu0 0
  %1711 = vmatprep.subr.bf16.mxu0 0
  %1712 = vmatpush2.bf16.msra.mxu0 0
  %1713 = vmatprep.subr.bf16.mxu0 0
  %1714 = vmatpush2.bf16.msra.mxu0 0
  %1715 = vmatprep.subr.bf16.mxu0 0
  %1716 = vmatpush2.bf16.msra.mxu0 0
  %1717 = vmatprep.subr.bf16.mxu0 0
  %1718 = vmatpush2.bf16.msra.mxu0 0
  %1719 = vmatprep.subr.bf16.mxu0 0
  %1720 = vmatpush2.bf16.msra.mxu0 0
  %1721 = vmatprep.subr.bf16.mxu0 0
  %1722 = vmatpush2.bf16.msra.mxu0 0
  %1723 = vmatprep.subr.bf16.mxu0 0
  %1724 = vmatpush2.bf16.msra.mxu0 0
  %1725 = vmatprep.mubr.bf16.mxu0 0
  %1726 = vmatmul.mubr.bf16.gmra.mxu0 %v1638
  %v1727 = vpop.f32.mrf.mxu0
  %v1728 = vadd.f32 %v1635, %v1727
  %v1729 = vpop.f32.mrf.mxu0
  %v1730 = vadd.f32 %v1635, %v1729
  %v1731 = vpop.f32.mrf.mxu0
  %v1732 = vpop.f32.mrf.mxu0
  %1733 = vdwg.mxu0
  %v1734 = vmax.f32 %v1687, 0.0
  %v1735 = vmax.f32 %v1689, 0.0
  %v1736 = vmax.f32 %v1728, 0.0
  %v1737 = vmax.f32 %v1730, 0.0
  %v1738 = vld [vmem:[%s15] sm:$0x1]
  %v1739 = vpack.c.bf16 %v1734, %v1734
  %v1740 = vpack.c.bf16 %v1735, %v1735
  %v1741 = vpack.c.bf16 %v1736, %v1736
  %v1742 = vpack.c.bf16 %v1737, %v1737
  %v1743 = vld [vmem:[#allocation2] sm:$0x1]
  %1745 = vset.pattern.permute.xlu0 0
  %1746 = vperm.xlu0 %1745, %v1743
  %v1747 = vpop.permute.xlu0 %1746
  %v1749 = vlaneseq
  %v1750 = vshrl.u32 %v1749, 7
  %v1751 = vsub.s32 0, %v1750
  %v1752 = vrot.slane %v1747, %v1751
  %v1754 = vsel %vm422, %v1738, 0
  %v1757 = vsel %vm1279, %v1739, 0
  %v1760 = vsel %vm1279, %v1740, 0
  %v1763 = vsel %vm1279, %v1741, 0
  %v1766 = vsel %vm1279, %v1742, 0
  %1768 = vmatprep.subr.bf16.mxu0 0
  %1769 = vmatpush1.bf16.msra.mxu0 0
  %1770 = vmatprep.subr.bf16.mxu0 0
  %1771 = vmatpush1.bf16.msra.mxu0 0
  %1772 = vmatprep.subr.bf16.mxu0 0
  %1773 = vmatpush1.bf16.msra.mxu0 0
  %1774 = vmatprep.subr.bf16.mxu0 0
  %1775 = vmatpush1.bf16.msra.mxu0 0
  %1776 = vmatprep.subr.bf16.mxu0 0
  %1777 = vmatpush1.bf16.msra.mxu0 0
  %1778 = vmatprep.subr.bf16.mxu0 0
  %1779 = vmatpush1.bf16.msra.mxu0 0
  %1780 = vmatprep.subr.bf16.mxu0 0
  %1781 = vmatpush1.bf16.msra.mxu0 0
  %1782 = vmatprep.subr.bf16.mxu0 %v1760
  %1783 = vmatpush1.bf16.msra.mxu0 %v1757
  %1784 = vmatprep.subr.bf16.mxu0 0
  %1785 = vmatpush2.bf16.msra.mxu0 0
  %1786 = vmatprep.subr.bf16.mxu0 0
  %1787 = vmatpush2.bf16.msra.mxu0 0
  %1788 = vmatprep.subr.bf16.mxu0 0
  %1789 = vmatpush2.bf16.msra.mxu0 0
  %1790 = vmatprep.subr.bf16.mxu0 0
  %1791 = vmatpush2.bf16.msra.mxu0 0
  %1792 = vmatprep.subr.bf16.mxu0 0
  %1793 = vmatpush2.bf16.msra.mxu0 0
  %1794 = vmatprep.subr.bf16.mxu0 0
  %1795 = vmatpush2.bf16.msra.mxu0 0
  %1796 = vmatprep.subr.bf16.mxu0 0
  %1797 = vmatpush2.bf16.msra.mxu0 0
  %1798 = vmatprep.subr.bf16.mxu0 0
  %1799 = vmatpush2.bf16.msra.mxu0 0
  %1800 = vmatprep.mubr.bf16.mxu0 0
  %1801 = vmatmul.mubr.bf16.gmra.mxu0 %v1754
  %v1802 = vpop.f32.mrf.mxu0
  %v1803 = vadd.f32 %v1752, %v1802
  %v1804 = vpop.f32.mrf.mxu0
  %v1805 = vadd.f32 %v1752, %v1804
  %v1806 = vpop.f32.mrf.mxu0
  %v1807 = vpop.f32.mrf.mxu0
  %1808 = vdwg.mxu0
  %1809 = vmatprep.subr.bf16.mxu0 0
  %1810 = vmatpush1.bf16.msra.mxu0 0
  %1811 = vmatprep.subr.bf16.mxu0 0
  %1812 = vmatpush1.bf16.msra.mxu0 0
  %1813 = vmatprep.subr.bf16.mxu0 0
  %1814 = vmatpush1.bf16.msra.mxu0 0
  %1815 = vmatprep.subr.bf16.mxu0 0
  %1816 = vmatpush1.bf16.msra.mxu0 0
  %1817 = vmatprep.subr.bf16.mxu0 0
  %1818 = vmatpush1.bf16.msra.mxu0 0
  %1819 = vmatprep.subr.bf16.mxu0 0
  %1820 = vmatpush1.bf16.msra.mxu0 0
  %1821 = vmatprep.subr.bf16.mxu0 0
  %1822 = vmatpush1.bf16.msra.mxu0 0
  %1823 = vmatprep.subr.bf16.mxu0 %v1766
  %1824 = vmatpush1.bf16.msra.mxu0 %v1763
  %1825 = vmatprep.subr.bf16.mxu0 0
  %1826 = vmatpush2.bf16.msra.mxu0 0
  %1827 = vmatprep.subr.bf16.mxu0 0
  %1828 = vmatpush2.bf16.msra.mxu0 0
  %1829 = vmatprep.subr.bf16.mxu0 0
  %1830 = vmatpush2.bf16.msra.mxu0 0
  %1831 = vmatprep.subr.bf16.mxu0 0
  %1832 = vmatpush2.bf16.msra.mxu0 0
  %1833 = vmatprep.subr.bf16.mxu0 0
  %1834 = vmatpush2.bf16.msra.mxu0 0
  %1835 = vmatprep.subr.bf16.mxu0 0
  %1836 = vmatpush2.bf16.msra.mxu0 0
  %1837 = vmatprep.subr.bf16.mxu0 0
  %1838 = vmatpush2.bf16.msra.mxu0 0
  %1839 = vmatprep.subr.bf16.mxu0 0
  %1840 = vmatpush2.bf16.msra.mxu0 0
  %1841 = vmatprep.mubr.bf16.mxu0 0
  %1842 = vmatmul.mubr.bf16.gmra.mxu0 %v1754
  %v1843 = vpop.f32.mrf.mxu0
  %v1844 = vadd.f32 %v1752, %v1843
  %v1845 = vpop.f32.mrf.mxu0
  %v1846 = vadd.f32 %v1752, %v1845
  %v1847 = vpop.f32.mrf.mxu0
  %v1848 = vpop.f32.mrf.mxu0
  %1849 = vdwg.mxu0
  %v1850 = vlaneseq
  %v1851 = vshrl.u32 %v1850, 7
  %v1852 = vsub.s32 0, %v1851
  %v1853 = vrot.slane %v1803, %v1852
  %v1854 = vlaneseq
  %v1855 = vshrl.u32 %v1854, 7
  %v1856 = vsub.s32 0, %v1855
  %v1857 = vrot.slane %v1805, %v1856
  %v1858 = vlaneseq
  %v1859 = vshrl.u32 %v1858, 7
  %v1860 = vsub.s32 0, %v1859
  %v1861 = vrot.slane %v1844, %v1860
  %v1862 = vlaneseq
  %v1863 = vshrl.u32 %v1862, 7
  %v1864 = vsub.s32 0, %v1863
  %v1865 = vrot.slane %v1846, %v1864
  %v1866 = vadd.f32 %v1853, %v630
  %v1867 = vadd.f32 %v1857, %v632
  %v1868 = vadd.f32 %v1861, %v719
  %v1869 = vadd.f32 %v1865, %v721
  %v1870 = vadd.f32 %v1853, %v636
  %v1871 = vadd.f32 %v1857, %v638
  %v1872 = vadd.f32 %v1861, %v725
  %v1873 = vadd.f32 %v1865, %v727
  %v1874 = vadd.f32 %v1853, %v642
  %v1875 = vadd.f32 %v1857, %v644
  %v1876 = vadd.f32 %v1861, %v731
  %v1877 = vadd.f32 %v1865, %v733
  %v1878 = vadd.f32 %v1853, %v648
  %v1879 = vadd.f32 %v1857, %v650
  %v1880 = vadd.f32 %v1861, %v737
  %v1881 = vadd.f32 %v1865, %v739
  %v1882 = vxor.u32 %v1866, 2147483648
  %v1883 = vxor.u32 %v1867, 2147483648
  %v1884 = vxor.u32 %v1868, 2147483648
  %v1885 = vxor.u32 %v1869, 2147483648
  %v1886 = vxor.u32 %v1870, 2147483648
  %v1887 = vxor.u32 %v1871, 2147483648
  %v1888 = vxor.u32 %v1872, 2147483648
  %v1889 = vxor.u32 %v1873, 2147483648
  %v1890 = vxor.u32 %v1874, 2147483648
  %v1891 = vxor.u32 %v1875, 2147483648
  %v1892 = vxor.u32 %v1876, 2147483648
  %v1893 = vxor.u32 %v1877, 2147483648
  %v1894 = vxor.u32 %v1878, 2147483648
  %v1895 = vxor.u32 %v1879, 2147483648
  %v1896 = vxor.u32 %v1880, 2147483648
  %v1897 = vxor.u32 %v1881, 2147483648
  %v1898 = vmul.f32 %v1882, 1.442695
  %v1899 = vpow.pop %v1898
  %v1900 = vmul.f32 %v1883, 1.442695
  %v1901 = vpow.pop %v1900
  %v1902 = vmul.f32 %v1884, 1.442695
  %v1903 = vpow.pop %v1902
  %v1904 = vmul.f32 %v1885, 1.442695
  %v1905 = vpow.pop %v1904
  %v1906 = vmul.f32 %v1886, 1.442695
  %v1907 = vpow.pop %v1906
  %v1908 = vmul.f32 %v1887, 1.442695
  %v1909 = vpow.pop %v1908
  %v1910 = vmul.f32 %v1888, 1.442695
  %v1911 = vpow.pop %v1910
  %v1912 = vmul.f32 %v1889, 1.442695
  %v1913 = vpow.pop %v1912
  %v1914 = vmul.f32 %v1890, 1.442695
  %v1915 = vpow.pop %v1914
  %v1916 = vmul.f32 %v1891, 1.442695
  %v1917 = vpow.pop %v1916
  %v1918 = vmul.f32 %v1892, 1.442695
  %v1919 = vpow.pop %v1918
  %v1920 = vmul.f32 %v1893, 1.442695
  %v1921 = vpow.pop %v1920
  %v1922 = vmul.f32 %v1894, 1.442695
  %v1923 = vpow.pop %v1922
  %v1924 = vmul.f32 %v1895, 1.442695
  %v1925 = vpow.pop %v1924
  %v1926 = vmul.f32 %v1896, 1.442695
  %v1927 = vpow.pop %v1926
  %v1928 = vmul.f32 %v1897, 1.442695
  %v1929 = vpow.pop %v1928
  %v1930 = vadd.f32 %v1899, 1.0
  %v1931 = vadd.f32 %v1901, 1.0
  %v1932 = vadd.f32 %v1903, 1.0
  %v1933 = vadd.f32 %v1905, 1.0
  %v1934 = vadd.f32 %v1907, 1.0
  %v1935 = vadd.f32 %v1909, 1.0
  %v1936 = vadd.f32 %v1911, 1.0
  %v1937 = vadd.f32 %v1913, 1.0
  %v1938 = vadd.f32 %v1915, 1.0
  %v1939 = vadd.f32 %v1917, 1.0
  %v1940 = vadd.f32 %v1919, 1.0
  %v1941 = vadd.f32 %v1921, 1.0
  %v1942 = vadd.f32 %v1923, 1.0
  %v1943 = vadd.f32 %v1925, 1.0
  %v1944 = vadd.f32 %v1927, 1.0
  %v1945 = vadd.f32 %v1929, 1.0
  %v1946 = vrcp.pop %v1930
  %v1947 = vmul.f32 1.0, %v1946
  %v1948 = vrcp.pop %v1931
  %v1949 = vmul.f32 1.0, %v1948
  %v1950 = vrcp.pop %v1932
  %v1951 = vmul.f32 1.0, %v1950
  %v1952 = vrcp.pop %v1933
  %v1953 = vmul.f32 1.0, %v1952
  %v1954 = vrcp.pop %v1934
  %v1955 = vmul.f32 1.0, %v1954
  %v1956 = vrcp.pop %v1935
  %v1957 = vmul.f32 1.0, %v1956
  %v1958 = vrcp.pop %v1936
  %v1959 = vmul.f32 1.0, %v1958
  %v1960 = vrcp.pop %v1937
  %v1961 = vmul.f32 1.0, %v1960
  %v1962 = vrcp.pop %v1938
  %v1963 = vmul.f32 1.0, %v1962
  %v1964 = vrcp.pop %v1939
  %v1965 = vmul.f32 1.0, %v1964
  %v1966 = vrcp.pop %v1940
  %v1967 = vmul.f32 1.0, %v1966
  %v1968 = vrcp.pop %v1941
  %v1969 = vmul.f32 1.0, %v1968
  %v1970 = vrcp.pop %v1942
  %v1971 = vmul.f32 1.0, %v1970
  %v1972 = vrcp.pop %v1943
  %v1973 = vmul.f32 1.0, %v1972
  %v1974 = vrcp.pop %v1944
  %v1975 = vmul.f32 1.0, %v1974
  %v1976 = vrcp.pop %v1945
  %v1977 = vmul.f32 1.0, %v1976
  %v1978 = vadd.f32 %v1947, 1.0
  %v1979 = vadd.f32 %v1949, 1.0
  %v1980 = vadd.f32 %v1951, 1.0
  %v1981 = vadd.f32 %v1953, 1.0
  %v1982 = vadd.f32 %v1955, 1.0
  %v1983 = vadd.f32 %v1957, 1.0
  %v1984 = vadd.f32 %v1959, 1.0
  %v1985 = vadd.f32 %v1961, 1.0
  %v1986 = vadd.f32 %v1963, 1.0
  %v1987 = vadd.f32 %v1965, 1.0
  %v1988 = vadd.f32 %v1967, 1.0
  %v1989 = vadd.f32 %v1969, 1.0
  %v1990 = vadd.f32 %v1971, 1.0
  %v1991 = vadd.f32 %v1973, 1.0
  %v1992 = vadd.f32 %v1975, 1.0
  %v1993 = vadd.f32 %v1977, 1.0
  %v1994 = vmul.f32 %v1978, %v62
  %v1995 = vmul.f32 %v1979, %v63
  %v1996 = vmul.f32 %v1980, %v64
  %v1997 = vmul.f32 %v1981, %v65
  %v1998 = vmul.f32 %v1982, %v66
  %v1999 = vmul.f32 %v1983, %v67
  %v2000 = vmul.f32 %v1984, %v68
  %v2001 = vmul.f32 %v1985, %v69
  %v2002 = vmul.f32 %v1986, %v70
  %v2003 = vmul.f32 %v1987, %v71
  %v2004 = vmul.f32 %v1988, %v72
  %v2005 = vmul.f32 %v1989, %v73
  %v2006 = vmul.f32 %v1990, %v74
  %v2007 = vmul.f32 %v1991, %v75
  %v2008 = vmul.f32 %v1992, %v76
  %v2009 = vmul.f32 %v1993, %v77
  %2010 = vst [vmem:[%s18] sm:$0xff] %v1994
  %2011 = vst [vmem:[%s18 + $0x8] sm:$0xff] %v1995
  %2012 = vst [vmem:[%s18 + $0x10] sm:$0xff] %v1996
  %2013 = vst [vmem:[%s18 + $0x18] sm:$0xff] %v1997
  %2014 = vst [vmem:[%s18 + $0x20] sm:$0xff] %v1998
  %2015 = vst [vmem:[%s18 + $0x28] sm:$0xff] %v1999
  %2016 = vst [vmem:[%s18 + $0x30] sm:$0xff] %v2000
  %2017 = vst [vmem:[%s18 + $0x38] sm:$0xff] %v2001
  %2018 = vst [vmem:[%s18 + $0x40] sm:$0xff] %v2002
  %2019 = vst [vmem:[%s18 + $0x48] sm:$0xff] %v2003
  %2020 = vst [vmem:[%s18 + $0x50] sm:$0xff] %v2004
  %2021 = vst [vmem:[%s18 + $0x58] sm:$0xff] %v2005
  %2022 = vst [vmem:[%s18 + $0x60] sm:$0xff] %v2006
  %2023 = vst [vmem:[%s18 + $0x68] sm:$0xff] %v2007
  %2024 = vst [vmem:[%s18 + $0x70] sm:$0xff] %v2008
  %2025 = vst [vmem:[%s18 + $0x78] sm:$0xff] %v2009
  // Predicated region
  $region74: #{bam_pallas.1} parent=0 // pred_check
    _
  $region75: #{bam_pallas.1} parent=0 // pred_check_branch
    %2027 = sbr.rel (0) target = $region77
  $region76: #{bam_pallas.1} parent=0 // pred_region
    _
  $region77: #{bam_pallas.1} parent=0 // pred_fallthru
    _
  // Predicated region
  $region78: #{bam_pallas.1} parent=0 // pred_check
    _
  $region79: #{bam_pallas.1} parent=0 // pred_check_branch
    %2029 = sbr.rel (0) target = $region81
  $region80: #{bam_pallas.1} parent=0 // pred_region
    _
  $region81: #{bam_pallas.1} parent=0 // pred_fallthru
    _

</llo_original>
